<compile_context>
chip_gen: v5e
topology: v5e:2x2
jax: 0.10.0
libtpu: 0.0.40
codegen_flags: <defaults>
</compile_context>

<pallas_src>
import functools

import jax
import jax.numpy as jnp
from jax import lax
from jax.experimental import pallas as pl
from jax.experimental.pallas import tpu as pltpu


# ----------------------------- Pallas kernel -------------------------------


def _gru_seq_kernel(
    x_ref,        # (T*B, D)   time-major flattened input
    h1_ref,       # (B, H)     initial hidden state, layer 1
    h2_ref,       # (B, H)     initial hidden state, layer 2
    wi1_ref,      # (D, 3H)    GRUCell 1 input weights (gate order r, z, n)
    wh1_ref,      # (H, 3H)    GRUCell 1 hidden weights
    b1_ref,       # (1, 3H)    bi1 with bh1 folded into the r,z thirds
    bh1n_ref,     # (1, H)     bh1 n-gate part (must stay inside r * (...))
    wi2_ref,      # (H, 3H)    GRUCell 2 input weights
    wh2_ref,      # (H, 3H)    GRUCell 2 hidden weights
    b2rz_ref,     # (1, 2H)    bi2 + bh2, r and z thirds
    bi2n_ref,     # (1, H)     bi2 n-gate part
    bh2n_ref,     # (1, H)     bh2 n-gate part
    wfc_ref,      # (H, D)     Linear weight (pre-transposed)
    bfc_ref,      # (1, D)     Linear bias
    out_ref,      # (T*B, D)   time-major flattened output
    h1_out_ref,   # (B, H)     final hidden 1
    h2_out_ref,   # (B, H)     final hidden 2
    *, T, B, H,
):
    f32 = jnp.float32

    # ---- prologue: hoist the non-recurrent input projection of cell 1 ------
    # One (T*B, D) @ (D, 3H) matmul instead of T tiny ones on the serial path.
    # b1 already contains bi1 (all gates) + bh1 (r, z gates only).
    gi1_all = (
        jnp.dot(x_ref[...], wi1_ref[...], preferred_element_type=f32)
        + b1_ref[...]
    )                                                         # (T*B, 3H)

    wh1 = wh1_ref[...]
    wi2 = wi2_ref[...]
    wh2 = wh2_ref[...]

    # Broadcast the small per-gate biases once, outside the loop (JAX does not
    # CSE broadcast_in_dim; in-loop adds of (1,H) would emit T broadcasts).
    bh1n = jnp.broadcast_to(bh1n_ref[...], (B, H))
    b2rz = jnp.broadcast_to(b2rz_ref[...], (B, 2 * H))
    bi2n = jnp.broadcast_to(bi2n_ref[...], (B, H))
    bh2n = jnp.broadcast_to(bh2n_ref[...], (B, H))

    h1 = h1_ref[...]
    h2 = h2_ref[...]

    h2_steps = []
    # Static Python loop over T: fully unrolled, the LLO scheduler sees the
    # whole window; only h-dependent matmuls + gate math stay on the chain
    # (gh2 of step t depends only on h2 of step t-1, so the scheduler can
    # overlap it with cell-1 work of the same step).
    for t in range(T):
        # ---- GRUCell 1 (PyTorch semantics, gate order r, z, n) ----
        gi1 = gi1_all[t * B:(t + 1) * B, :]                   # (B, 3H) static slice
        gh1 = jnp.dot(h1, wh1, preferred_element_type=f32)    # (B, 3H)
        rz1 = jax.nn.sigmoid(gi1[:, :2 * H] + gh1[:, :2 * H])
        r1 = rz1[:, :H]
        z1 = rz1[:, H:]
        n1 = jnp.tanh(gi1[:, 2 * H:] + r1 * (gh1[:, 2 * H:] + bh1n))
        h1 = (1.0 - z1) * n1 + z1 * h1

        # ---- GRUCell 2 ----
        gi2 = jnp.dot(h1, wi2, preferred_element_type=f32)    # (B, 3H)
        gh2 = jnp.dot(h2, wh2, preferred_element_type=f32)    # (B, 3H)
        rz2 = jax.nn.sigmoid(gi2[:, :2 * H] + gh2[:, :2 * H] + b2rz)
        r2 = rz2[:, :H]
        z2 = rz2[:, H:]
        n2 = jnp.tanh(gi2[:, 2 * H:] + bi2n + r2 * (gh2[:, 2 * H:] + bh2n))
        h2 = (1.0 - z2) * n2 + z2 * h2

        h2_steps.append(h2)

    # ---- epilogue: batched fc projection, single output store --------------
    h2_all = jnp.concatenate(h2_steps, axis=0)                # (T*B, H)
    y = jnp.dot(h2_all, wfc_ref[...], preferred_element_type=f32) + bfc_ref[...]

    out_ref[...] = y
    h1_out_ref[...] = h1
    h2_out_ref[...] = h2


# ------------------------------ wrapper ------------------------------------


@jax.jit
def multi_regression_gru(x, h_1, h_2, params):
    """x: (B, T, D) batch-major (PyTorch convention). Returns (out, h1, h2)."""
    B, T, D = x.shape
    H = h_1.shape[-1]
    (wi1, wh1, bi1, bh1, wi2, wh2, bi2, bh2, wfc, bfc) = params

    # Bias folding (done once, outside the kernel):
    #   cell 1: fold bi1 (all gates) + bh1 (r,z gates) into one bias added to
    #           the hoisted input projection; keep bh1_n separate (it lives
    #           inside r * (h @ Whn + bh_n)).
    #   cell 2: fold (bi2 + bh2) for r,z; keep bi2_n / bh2_n separate.
    b1 = bi1 + jnp.concatenate(
        [bh1[:, :2 * H], jnp.zeros((1, H), bh1.dtype)], axis=1)
    bh1n = bh1[:, 2 * H:]
    b2rz = bi2[:, :2 * H] + bh2[:, :2 * H]
    bi2n = bi2[:, 2 * H:]
    bh2n = bh2[:, 2 * H:]

    # Time-major flattened layout: rows [t*B:(t+1)*B] hold timestep t.
    x_flat = jnp.transpose(x, (1, 0, 2)).reshape(T * B, D)

    vmem = pl.BlockSpec(memory_space=pltpu.MemorySpace.VMEM)

    out_flat, h1_f, h2_f = pl.pallas_call(
        functools.partial(_gru_seq_kernel, T=T, B=B, H=H),
        out_shape=(
            jax.ShapeDtypeStruct((T * B, D), jnp.float32),
            jax.ShapeDtypeStruct((B, H), jnp.float32),
            jax.ShapeDtypeStruct((B, H), jnp.float32),
        ),
        in_specs=[vmem] * 14,
        out_specs=(vmem, vmem, vmem),
    )(x_flat, h_1, h_2, wi1, wh1, b1, bh1n, wi2, wh2, b2rz, bi2n, bh2n,
      wfc, bfc)

    out = jnp.transpose(out_flat.reshape(T, B, D), (1, 0, 2))
    return out, h1_f, h2_f


# ------------------------- pure-JAX reference -------------------------------


def reference_forward(x, h_1, h_2, params):
    (wi1, wh1, bi1, bh1, wi2, wh2, bi2, bh2, wfc, bfc) = params
    H = h_1.shape[-1]

    def cell(x_t, h, wi, wh, bi, bh):
        gi = x_t @ wi + bi
        gh = h @ wh + bh
        r = jax.nn.sigmoid(gi[:, :H] + gh[:, :H])
        z = jax.nn.sigmoid(gi[:, H:2 * H] + gh[:, H:2 * H])
        n = jnp.tanh(gi[:, 2 * H:] + r * gh[:, 2 * H:])
        return (1.0 - z) * n + z * h

    def step(carry, x_t):
        h1, h2 = carry
        h1 = cell(x_t, h1, wi1, wh1, bi1, bh1)
        h2 = cell(h1, h2, wi2, wh2, bi2, bh2)
        y = h2 @ wfc + bfc
        return (h1, h2), y

    (h1_f, h2_f), ys = lax.scan(step, (h_1, h_2), jnp.transpose(x, (1, 0, 2)))
    return jnp.transpose(ys, (1, 0, 2)), h1_f, h2_f


# --------------------------------- main --------------------------------------


if __name__ == "__main__":
    # Small shapes consistent with the module (input_dim=6, hidden_dim=16,
    # sequence_len=10), with a small batch:
    B, T, D, H = 8, 10, 6, 16

    key = jax.random.PRNGKey(0)
    ks = jax.random.split(key, 12)
    scale_h = 1.0 / jnp.sqrt(H)

    def u(k, shape):
        return jax.random.uniform(k, shape, jnp.float32, -scale_h, scale_h)

    # Parameters (stored pre-transposed for y = x @ W):
    #   GRUCell weights packed as (in_dim, 3H), gate order (r, z, n).
    params = (
        u(ks[0], (D, 3 * H)),  u(ks[1], (H, 3 * H)),   # cell1 Wi, Wh
        u(ks[2], (1, 3 * H)),  u(ks[3], (1, 3 * H)),   # cell1 bi, bh
        u(ks[4], (H, 3 * H)),  u(ks[5], (H, 3 * H)),   # cell2 Wi, Wh
        u(ks[6], (1, 3 * H)),  u(ks[7], (1, 3 * H)),   # cell2 bi, bh
        u(ks[8], (H, D)),      u(ks[9], (1, D)),       # fc W^T, b
    )

    x = jax.random.normal(ks[10], (B, T, D), jnp.float32)
    h_1 = jnp.zeros((B, H), jnp.float32)   # init_hidden()
    h_2 = jnp.zeros((B, H), jnp.float32)

    out, h1_f, h2_f = multi_regression_gru(x, h_1, h_2, params)
    jax.block_until_ready((out, h1_f, h2_f))

    ref_out, ref_h1, ref_h2 = reference_forward(x, h_1, h_2, params)
    assert out.shape == (B, T, D) and h1_f.shape == (B, H) and h2_f.shape == (B, H)
    assert jnp.allclose(out, ref_out, atol=1e-5, rtol=1e-5)
    assert jnp.allclose(h1_f, ref_h1, atol=1e-5, rtol=1e-5)
    assert jnp.allclose(h2_f, ref_h2, atol=1e-5, rtol=1e-5)

    print("KERNEL_OK")
</pallas_src>

<mosaic_0001>
module attributes {stable_mosaic.version = 11 : i64} {
  func.func @_gru_seq_kernel(%arg0: memref<80x6xf32, #tpu.memory_space<vmem>>, %arg1: memref<8x16xf32, #tpu.memory_space<vmem>>, %arg2: memref<8x16xf32, #tpu.memory_space<vmem>>, %arg3: memref<6x48xf32, #tpu.memory_space<vmem>>, %arg4: memref<16x48xf32, #tpu.memory_space<vmem>>, %arg5: memref<1x48xf32, #tpu.memory_space<vmem>>, %arg6: memref<1x16xf32, #tpu.memory_space<vmem>>, %arg7: memref<16x48xf32, #tpu.memory_space<vmem>>, %arg8: memref<16x48xf32, #tpu.memory_space<vmem>>, %arg9: memref<1x32xf32, #tpu.memory_space<vmem>>, %arg10: memref<1x16xf32, #tpu.memory_space<vmem>>, %arg11: memref<1x16xf32, #tpu.memory_space<vmem>>, %arg12: memref<16x6xf32, #tpu.memory_space<vmem>>, %arg13: memref<1x6xf32, #tpu.memory_space<vmem>>, %arg14: memref<80x6xf32, #tpu.memory_space<vmem>>, %arg15: memref<8x16xf32, #tpu.memory_space<vmem>>, %arg16: memref<8x16xf32, #tpu.memory_space<vmem>>) attributes {dimension_semantics = [], scalar_prefetch = 0 : i64, scratch_operands = 0 : i64, tpu.core_type = #tpu.core_type<tc>} {
    %c0 = arith.constant 0 : index
    %c0_0 = arith.constant 0 : index
    %0 = vector.load %arg0[%c0, %c0_0] : memref<80x6xf32, #tpu.memory_space<vmem>>, vector<80x6xf32>
    %c0_1 = arith.constant 0 : index
    %c0_2 = arith.constant 0 : index
    %1 = vector.load %arg3[%c0_1, %c0_2] : memref<6x48xf32, #tpu.memory_space<vmem>>, vector<6x48xf32>
    %cst = arith.constant dense<0.000000e+00> : vector<80x48xf32>
    %2 = tpu.matmul %0, %1, %cst {dimension_numbers = #tpu.dot_dimension_numbers<[1], [0], [0], [1], [0, 0, 1, 1], [], []>} : vector<80x6xf32>, vector<6x48xf32>, vector<80x48xf32> -> vector<80x48xf32>
    %c0_3 = arith.constant 0 : index
    %c0_4 = arith.constant 0 : index
    %3 = vector.load %arg5[%c0_3, %c0_4] : memref<1x48xf32, #tpu.memory_space<vmem>>, vector<1x48xf32>
    %4 = vector.broadcast %3 : vector<1x48xf32> to vector<80x48xf32>
    %5 = arith.addf %2, %4 : vector<80x48xf32>
    %c0_5 = arith.constant 0 : index
    %c0_6 = arith.constant 0 : index
    %6 = vector.load %arg4[%c0_5, %c0_6] : memref<16x48xf32, #tpu.memory_space<vmem>>, vector<16x48xf32>
    %c0_7 = arith.constant 0 : index
    %c0_8 = arith.constant 0 : index
    %7 = vector.load %arg7[%c0_7, %c0_8] : memref<16x48xf32, #tpu.memory_space<vmem>>, vector<16x48xf32>
    %c0_9 = arith.constant 0 : index
    %c0_10 = arith.constant 0 : index
    %8 = vector.load %arg8[%c0_9, %c0_10] : memref<16x48xf32, #tpu.memory_space<vmem>>, vector<16x48xf32>
    %c0_11 = arith.constant 0 : index
    %c0_12 = arith.constant 0 : index
    %9 = vector.load %arg6[%c0_11, %c0_12] : memref<1x16xf32, #tpu.memory_space<vmem>>, vector<1x16xf32>
    %10 = vector.shape_cast %9 : vector<1x16xf32> to vector<1x16xf32>
    %11 = vector.broadcast %10 : vector<1x16xf32> to vector<8x16xf32>
    %c0_13 = arith.constant 0 : index
    %c0_14 = arith.constant 0 : index
    %12 = vector.load %arg9[%c0_13, %c0_14] : memref<1x32xf32, #tpu.memory_space<vmem>>, vector<1x32xf32>
    %13 = vector.shape_cast %12 : vector<1x32xf32> to vector<1x32xf32>
    %14 = vector.broadcast %13 : vector<1x32xf32> to vector<8x32xf32>
    %c0_15 = arith.constant 0 : index
    %c0_16 = arith.constant 0 : index
    %15 = vector.load %arg10[%c0_15, %c0_16] : memref<1x16xf32, #tpu.memory_space<vmem>>, vector<1x16xf32>
    %16 = vector.shape_cast %15 : vector<1x16xf32> to vector<1x16xf32>
    %17 = vector.broadcast %16 : vector<1x16xf32> to vector<8x16xf32>
    %c0_17 = arith.constant 0 : index
    %c0_18 = arith.constant 0 : index
    %18 = vector.load %arg11[%c0_17, %c0_18] : memref<1x16xf32, #tpu.memory_space<vmem>>, vector<1x16xf32>
    %19 = vector.shape_cast %18 : vector<1x16xf32> to vector<1x16xf32>
    %20 = vector.broadcast %19 : vector<1x16xf32> to vector<8x16xf32>
    %c0_19 = arith.constant 0 : index
    %c0_20 = arith.constant 0 : index
    %21 = vector.load %arg1[%c0_19, %c0_20] : memref<8x16xf32, #tpu.memory_space<vmem>>, vector<8x16xf32>
    %c0_21 = arith.constant 0 : index
    %c0_22 = arith.constant 0 : index
    %22 = vector.load %arg2[%c0_21, %c0_22] : memref<8x16xf32, #tpu.memory_space<vmem>>, vector<8x16xf32>
    %23 = vector.extract_strided_slice %5 {offsets = [0, 0], sizes = [8, 48], strides = [1, 1]} : vector<80x48xf32> to vector<8x48xf32>
    %cst_23 = arith.constant dense<0.000000e+00> : vector<8x48xf32>
    %24 = tpu.matmul %21, %6, %cst_23 {dimension_numbers = #tpu.dot_dimension_numbers<[1], [0], [0], [1], [0, 0, 1, 1], [], []>} : vector<8x16xf32>, vector<16x48xf32>, vector<8x48xf32> -> vector<8x48xf32>
    %25 = vector.extract_strided_slice %23 {offsets = [0, 0], sizes = [8, 32], strides = [1, 1]} : vector<8x48xf32> to vector<8x32xf32>
    %26 = vector.extract_strided_slice %24 {offsets = [0, 0], sizes = [8, 32], strides = [1, 1]} : vector<8x48xf32> to vector<8x32xf32>
    %27 = arith.addf %25, %26 : vector<8x32xf32>
    %28 = arith.negf %27 : vector<8x32xf32>
    %29 = math.exp %28 : vector<8x32xf32>
    %cst_24 = arith.constant 1.000000e+00 : f32
    %30 = vector.broadcast %cst_24 : f32 to vector<8x32xf32>
    %31 = arith.addf %30, %29 : vector<8x32xf32>
    %32 = arith.divf %30, %31 : vector<8x32xf32>
    %33 = vector.extract_strided_slice %32 {offsets = [0, 0], sizes = [8, 16], strides = [1, 1]} : vector<8x32xf32> to vector<8x16xf32>
    %34 = vector.extract_strided_slice %32 {offsets = [0, 16], sizes = [8, 16], strides = [1, 1]} : vector<8x32xf32> to vector<8x16xf32>
    %35 = vector.extract_strided_slice %23 {offsets = [0, 32], sizes = [8, 16], strides = [1, 1]} : vector<8x48xf32> to vector<8x16xf32>
    %36 = vector.extract_strided_slice %24 {offsets = [0, 32], sizes = [8, 16], strides = [1, 1]} : vector<8x48xf32> to vector<8x16xf32>
    %37 = arith.addf %36, %11 : vector<8x16xf32>
    %38 = arith.mulf %33, %37 : vector<8x16xf32>
    %39 = arith.addf %35, %38 : vector<8x16xf32>
    %40 = math.tanh %39 : vector<8x16xf32>
    %cst_25 = arith.constant 1.000000e+00 : f32
    %41 = vector.broadcast %cst_25 : f32 to vector<8x16xf32>
    %42 = arith.subf %41, %34 : vector<8x16xf32>
    %43 = arith.mulf %42, %40 : vector<8x16xf32>
    %44 = arith.mulf %34, %21 : vector<8x16xf32>
    %45 = arith.addf %43, %44 : vector<8x16xf32>
    %cst_26 = arith.constant dense<0.000000e+00> : vector<8x48xf32>
    %46 = tpu.matmul %45, %7, %cst_26 {dimension_numbers = #tpu.dot_dimension_numbers<[1], [0], [0], [1], [0, 0, 1, 1], [], []>} : vector<8x16xf32>, vector<16x48xf32>, vector<8x48xf32> -> vector<8x48xf32>
    %cst_27 = arith.constant dense<0.000000e+00> : vector<8x48xf32>
    %47 = tpu.matmul %22, %8, %cst_27 {dimension_numbers = #tpu.dot_dimension_numbers<[1], [0], [0], [1], [0, 0, 1, 1], [], []>} : vector<8x16xf32>, vector<16x48xf32>, vector<8x48xf32> -> vector<8x48xf32>
    %48 = vector.extract_strided_slice %46 {offsets = [0, 0], sizes = [8, 32], strides = [1, 1]} : vector<8x48xf32> to vector<8x32xf32>
    %49 = vector.extract_strided_slice %47 {offsets = [0, 0], sizes = [8, 32], strides = [1, 1]} : vector<8x48xf32> to vector<8x32xf32>
    %50 = arith.addf %48, %49 : vector<8x32xf32>
    %51 = arith.addf %50, %14 : vector<8x32xf32>
    %52 = arith.negf %51 : vector<8x32xf32>
    %53 = math.exp %52 : vector<8x32xf32>
    %cst_28 = arith.constant 1.000000e+00 : f32
    %54 = vector.broadcast %cst_28 : f32 to vector<8x32xf32>
    %55 = arith.addf %54, %53 : vector<8x32xf32>
    %56 = arith.divf %54, %55 : vector<8x32xf32>
    %57 = vector.extract_strided_slice %56 {offsets = [0, 0], sizes = [8, 16], strides = [1, 1]} : vector<8x32xf32> to vector<8x16xf32>
    %58 = vector.extract_strided_slice %56 {offsets = [0, 16], sizes = [8, 16], strides = [1, 1]} : vector<8x32xf32> to vector<8x16xf32>
    %59 = vector.extract_strided_slice %46 {offsets = [0, 32], sizes = [8, 16], strides = [1, 1]} : vector<8x48xf32> to vector<8x16xf32>
    %60 = arith.addf %59, %17 : vector<8x16xf32>
    %61 = vector.extract_strided_slice %47 {offsets = [0, 32], sizes = [8, 16], strides = [1, 1]} : vector<8x48xf32> to vector<8x16xf32>
    %62 = arith.addf %61, %20 : vector<8x16xf32>
    %63 = arith.mulf %57, %62 : vector<8x16xf32>
    %64 = arith.addf %60, %63 : vector<8x16xf32>
    %65 = math.tanh %64 : vector<8x16xf32>
    %cst_29 = arith.constant 1.000000e+00 : f32
    %66 = vector.broadcast %cst_29 : f32 to vector<8x16xf32>
    %67 = arith.subf %66, %58 : vector<8x16xf32>
    %68 = arith.mulf %67, %65 : vector<8x16xf32>
    %69 = arith.mulf %58, %22 : vector<8x16xf32>
    %70 = arith.addf %68, %69 : vector<8x16xf32>
    %71 = vector.extract_strided_slice %5 {offsets = [8, 0], sizes = [8, 48], strides = [1, 1]} : vector<80x48xf32> to vector<8x48xf32>
    %cst_30 = arith.constant dense<0.000000e+00> : vector<8x48xf32>
    %72 = tpu.matmul %45, %6, %cst_30 {dimension_numbers = #tpu.dot_dimension_numbers<[1], [0], [0], [1], [0, 0, 1, 1], [], []>} : vector<8x16xf32>, vector<16x48xf32>, vector<8x48xf32> -> vector<8x48xf32>
    %73 = vector.extract_strided_slice %71 {offsets = [0, 0], sizes = [8, 32], strides = [1, 1]} : vector<8x48xf32> to vector<8x32xf32>
    %74 = vector.extract_strided_slice %72 {offsets = [0, 0], sizes = [8, 32], strides = [1, 1]} : vector<8x48xf32> to vector<8x32xf32>
    %75 = arith.addf %73, %74 : vector<8x32xf32>
    %76 = arith.negf %75 : vector<8x32xf32>
    %77 = math.exp %76 : vector<8x32xf32>
    %cst_31 = arith.constant 1.000000e+00 : f32
    %78 = vector.broadcast %cst_31 : f32 to vector<8x32xf32>
    %79 = arith.addf %78, %77 : vector<8x32xf32>
    %80 = arith.divf %78, %79 : vector<8x32xf32>
    %81 = vector.extract_strided_slice %80 {offsets = [0, 0], sizes = [8, 16], strides = [1, 1]} : vector<8x32xf32> to vector<8x16xf32>
    %82 = vector.extract_strided_slice %80 {offsets = [0, 16], sizes = [8, 16], strides = [1, 1]} : vector<8x32xf32> to vector<8x16xf32>
    %83 = vector.extract_strided_slice %71 {offsets = [0, 32], sizes = [8, 16], strides = [1, 1]} : vector<8x48xf32> to vector<8x16xf32>
    %84 = vector.extract_strided_slice %72 {offsets = [0, 32], sizes = [8, 16], strides = [1, 1]} : vector<8x48xf32> to vector<8x16xf32>
    %85 = arith.addf %84, %11 : vector<8x16xf32>
    %86 = arith.mulf %81, %85 : vector<8x16xf32>
    %87 = arith.addf %83, %86 : vector<8x16xf32>
    %88 = math.tanh %87 : vector<8x16xf32>
    %cst_32 = arith.constant 1.000000e+00 : f32
    %89 = vector.broadcast %cst_32 : f32 to vector<8x16xf32>
    %90 = arith.subf %89, %82 : vector<8x16xf32>
    %91 = arith.mulf %90, %88 : vector<8x16xf32>
    %92 = arith.mulf %82, %45 : vector<8x16xf32>
    %93 = arith.addf %91, %92 : vector<8x16xf32>
    %cst_33 = arith.constant dense<0.000000e+00> : vector<8x48xf32>
    %94 = tpu.matmul %93, %7, %cst_33 {dimension_numbers = #tpu.dot_dimension_numbers<[1], [0], [0], [1], [0, 0, 1, 1], [], []>} : vector<8x16xf32>, vector<16x48xf32>, vector<8x48xf32> -> vector<8x48xf32>
    %cst_34 = arith.constant dense<0.000000e+00> : vector<8x48xf32>
    %95 = tpu.matmul %70, %8, %cst_34 {dimension_numbers = #tpu.dot_dimension_numbers<[1], [0], [0], [1], [0, 0, 1, 1], [], []>} : vector<8x16xf32>, vector<16x48xf32>, vector<8x48xf32> -> vector<8x48xf32>
    %96 = vector.extract_strided_slice %94 {offsets = [0, 0], sizes = [8, 32], strides = [1, 1]} : vector<8x48xf32> to vector<8x32xf32>
    %97 = vector.extract_strided_slice %95 {offsets = [0, 0], sizes = [8, 32], strides = [1, 1]} : vector<8x48xf32> to vector<8x32xf32>
    %98 = arith.addf %96, %97 : vector<8x32xf32>
    %99 = arith.addf %98, %14 : vector<8x32xf32>
    %100 = arith.negf %99 : vector<8x32xf32>
    %101 = math.exp %100 : vector<8x32xf32>
    %cst_35 = arith.constant 1.000000e+00 : f32
    %102 = vector.broadcast %cst_35 : f32 to vector<8x32xf32>
    %103 = arith.addf %102, %101 : vector<8x32xf32>
    %104 = arith.divf %102, %103 : vector<8x32xf32>
    %105 = vector.extract_strided_slice %104 {offsets = [0, 0], sizes = [8, 16], strides = [1, 1]} : vector<8x32xf32> to vector<8x16xf32>
    %106 = vector.extract_strided_slice %104 {offsets = [0, 16], sizes = [8, 16], strides = [1, 1]} : vector<8x32xf32> to vector<8x16xf32>
    %107 = vector.extract_strided_slice %94 {offsets = [0, 32], sizes = [8, 16], strides = [1, 1]} : vector<8x48xf32> to vector<8x16xf32>
    %108 = arith.addf %107, %17 : vector<8x16xf32>
    %109 = vector.extract_strided_slice %95 {offsets = [0, 32], sizes = [8, 16], strides = [1, 1]} : vector<8x48xf32> to vector<8x16xf32>
    %110 = arith.addf %109, %20 : vector<8x16xf32>
    %111 = arith.mulf %105, %110 : vector<8x16xf32>
    %112 = arith.addf %108, %111 : vector<8x16xf32>
    %113 = math.tanh %112 : vector<8x16xf32>
    %cst_36 = arith.constant 1.000000e+00 : f32
    %114 = vector.broadcast %cst_36 : f32 to vector<8x16xf32>
    %115 = arith.subf %114, %106 : vector<8x16xf32>
    %116 = arith.mulf %115, %113 : vector<8x16xf32>
    %117 = arith.mulf %106, %70 : vector<8x16xf32>
    %118 = arith.addf %116, %117 : vector<8x16xf32>
    %119 = vector.extract_strided_slice %5 {offsets = [16, 0], sizes = [8, 48], strides = [1, 1]} : vector<80x48xf32> to vector<8x48xf32>
    %cst_37 = arith.constant dense<0.000000e+00> : vector<8x48xf32>
    %120 = tpu.matmul %93, %6, %cst_37 {dimension_numbers = #tpu.dot_dimension_numbers<[1], [0], [0], [1], [0, 0, 1, 1], [], []>} : vector<8x16xf32>, vector<16x48xf32>, vector<8x48xf32> -> vector<8x48xf32>
    %121 = vector.extract_strided_slice %119 {offsets = [0, 0], sizes = [8, 32], strides = [1, 1]} : vector<8x48xf32> to vector<8x32xf32>
    %122 = vector.extract_strided_slice %120 {offsets = [0, 0], sizes = [8, 32], strides = [1, 1]} : vector<8x48xf32> to vector<8x32xf32>
    %123 = arith.addf %121, %122 : vector<8x32xf32>
    %124 = arith.negf %123 : vector<8x32xf32>
    %125 = math.exp %124 : vector<8x32xf32>
    %cst_38 = arith.constant 1.000000e+00 : f32
    %126 = vector.broadcast %cst_38 : f32 to vector<8x32xf32>
    %127 = arith.addf %126, %125 : vector<8x32xf32>
    %128 = arith.divf %126, %127 : vector<8x32xf32>
    %129 = vector.extract_strided_slice %128 {offsets = [0, 0], sizes = [8, 16], strides = [1, 1]} : vector<8x32xf32> to vector<8x16xf32>
    %130 = vector.extract_strided_slice %128 {offsets = [0, 16], sizes = [8, 16], strides = [1, 1]} : vector<8x32xf32> to vector<8x16xf32>
    %131 = vector.extract_strided_slice %119 {offsets = [0, 32], sizes = [8, 16], strides = [1, 1]} : vector<8x48xf32> to vector<8x16xf32>
    %132 = vector.extract_strided_slice %120 {offsets = [0, 32], sizes = [8, 16], strides = [1, 1]} : vector<8x48xf32> to vector<8x16xf32>
    %133 = arith.addf %132, %11 : vector<8x16xf32>
    %134 = arith.mulf %129, %133 : vector<8x16xf32>
    %135 = arith.addf %131, %134 : vector<8x16xf32>
    %136 = math.tanh %135 : vector<8x16xf32>
    %cst_39 = arith.constant 1.000000e+00 : f32
    %137 = vector.broadcast %cst_39 : f32 to vector<8x16xf32>
    %138 = arith.subf %137, %130 : vector<8x16xf32>
    %139 = arith.mulf %138, %136 : vector<8x16xf32>
    %140 = arith.mulf %130, %93 : vector<8x16xf32>
    %141 = arith.addf %139, %140 : vector<8x16xf32>
    %cst_40 = arith.constant dense<0.000000e+00> : vector<8x48xf32>
    %142 = tpu.matmul %141, %7, %cst_40 {dimension_numbers = #tpu.dot_dimension_numbers<[1], [0], [0], [1], [0, 0, 1, 1], [], []>} : vector<8x16xf32>, vector<16x48xf32>, vector<8x48xf32> -> vector<8x48xf32>
    %cst_41 = arith.constant dense<0.000000e+00> : vector<8x48xf32>
    %143 = tpu.matmul %118, %8, %cst_41 {dimension_numbers = #tpu.dot_dimension_numbers<[1], [0], [0], [1], [0, 0, 1, 1], [], []>} : vector<8x16xf32>, vector<16x48xf32>, vector<8x48xf32> -> vector<8x48xf32>
    %144 = vector.extract_strided_slice %142 {offsets = [0, 0], sizes = [8, 32], strides = [1, 1]} : vector<8x48xf32> to vector<8x32xf32>
    %145 = vector.extract_strided_slice %143 {offsets = [0, 0], sizes = [8, 32], strides = [1, 1]} : vector<8x48xf32> to vector<8x32xf32>
    %146 = arith.addf %144, %145 : vector<8x32xf32>
    %147 = arith.addf %146, %14 : vector<8x32xf32>
    %148 = arith.negf %147 : vector<8x32xf32>
    %149 = math.exp %148 : vector<8x32xf32>
    %cst_42 = arith.constant 1.000000e+00 : f32
    %150 = vector.broadcast %cst_42 : f32 to vector<8x32xf32>
    %151 = arith.addf %150, %149 : vector<8x32xf32>
    %152 = arith.divf %150, %151 : vector<8x32xf32>
    %153 = vector.extract_strided_slice %152 {offsets = [0, 0], sizes = [8, 16], strides = [1, 1]} : vector<8x32xf32> to vector<8x16xf32>
    %154 = vector.extract_strided_slice %152 {offsets = [0, 16], sizes = [8, 16], strides = [1, 1]} : vector<8x32xf32> to vector<8x16xf32>
    %155 = vector.extract_strided_slice %142 {offsets = [0, 32], sizes = [8, 16], strides = [1, 1]} : vector<8x48xf32> to vector<8x16xf32>
    %156 = arith.addf %155, %17 : vector<8x16xf32>
    %157 = vector.extract_strided_slice %143 {offsets = [0, 32], sizes = [8, 16], strides = [1, 1]} : vector<8x48xf32> to vector<8x16xf32>
    %158 = arith.addf %157, %20 : vector<8x16xf32>
    %159 = arith.mulf %153, %158 : vector<8x16xf32>
    %160 = arith.addf %156, %159 : vector<8x16xf32>
    %161 = math.tanh %160 : vector<8x16xf32>
    %cst_43 = arith.constant 1.000000e+00 : f32
    %162 = vector.broadcast %cst_43 : f32 to vector<8x16xf32>
    %163 = arith.subf %162, %154 : vector<8x16xf32>
    %164 = arith.mulf %163, %161 : vector<8x16xf32>
    %165 = arith.mulf %154, %118 : vector<8x16xf32>
    %166 = arith.addf %164, %165 : vector<8x16xf32>
    %167 = vector.extract_strided_slice %5 {offsets = [24, 0], sizes = [8, 48], strides = [1, 1]} : vector<80x48xf32> to vector<8x48xf32>
    %cst_44 = arith.constant dense<0.000000e+00> : vector<8x48xf32>
    %168 = tpu.matmul %141, %6, %cst_44 {dimension_numbers = #tpu.dot_dimension_numbers<[1], [0], [0], [1], [0, 0, 1, 1], [], []>} : vector<8x16xf32>, vector<16x48xf32>, vector<8x48xf32> -> vector<8x48xf32>
    %169 = vector.extract_strided_slice %167 {offsets = [0, 0], sizes = [8, 32], strides = [1, 1]} : vector<8x48xf32> to vector<8x32xf32>
    %170 = vector.extract_strided_slice %168 {offsets = [0, 0], sizes = [8, 32], strides = [1, 1]} : vector<8x48xf32> to vector<8x32xf32>
    %171 = arith.addf %169, %170 : vector<8x32xf32>
    %172 = arith.negf %171 : vector<8x32xf32>
    %173 = math.exp %172 : vector<8x32xf32>
    %cst_45 = arith.constant 1.000000e+00 : f32
    %174 = vector.broadcast %cst_45 : f32 to vector<8x32xf32>
    %175 = arith.addf %174, %173 : vector<8x32xf32>
    %176 = arith.divf %174, %175 : vector<8x32xf32>
    %177 = vector.extract_strided_slice %176 {offsets = [0, 0], sizes = [8, 16], strides = [1, 1]} : vector<8x32xf32> to vector<8x16xf32>
    %178 = vector.extract_strided_slice %176 {offsets = [0, 16], sizes = [8, 16], strides = [1, 1]} : vector<8x32xf32> to vector<8x16xf32>
    %179 = vector.extract_strided_slice %167 {offsets = [0, 32], sizes = [8, 16], strides = [1, 1]} : vector<8x48xf32> to vector<8x16xf32>
    %180 = vector.extract_strided_slice %168 {offsets = [0, 32], sizes = [8, 16], strides = [1, 1]} : vector<8x48xf32> to vector<8x16xf32>
    %181 = arith.addf %180, %11 : vector<8x16xf32>
    %182 = arith.mulf %177, %181 : vector<8x16xf32>
    %183 = arith.addf %179, %182 : vector<8x16xf32>
    %184 = math.tanh %183 : vector<8x16xf32>
    %cst_46 = arith.constant 1.000000e+00 : f32
    %185 = vector.broadcast %cst_46 : f32 to vector<8x16xf32>
    %186 = arith.subf %185, %178 : vector<8x16xf32>
    %187 = arith.mulf %186, %184 : vector<8x16xf32>
    %188 = arith.mulf %178, %141 : vector<8x16xf32>
    %189 = arith.addf %187, %188 : vector<8x16xf32>
    %cst_47 = arith.constant dense<0.000000e+00> : vector<8x48xf32>
    %190 = tpu.matmul %189, %7, %cst_47 {dimension_numbers = #tpu.dot_dimension_numbers<[1], [0], [0], [1], [0, 0, 1, 1], [], []>} : vector<8x16xf32>, vector<16x48xf32>, vector<8x48xf32> -> vector<8x48xf32>
    %cst_48 = arith.constant dense<0.000000e+00> : vector<8x48xf32>
    %191 = tpu.matmul %166, %8, %cst_48 {dimension_numbers = #tpu.dot_dimension_numbers<[1], [0], [0], [1], [0, 0, 1, 1], [], []>} : vector<8x16xf32>, vector<16x48xf32>, vector<8x48xf32> -> vector<8x48xf32>
    %192 = vector.extract_strided_slice %190 {offsets = [0, 0], sizes = [8, 32], strides = [1, 1]} : vector<8x48xf32> to vector<8x32xf32>
    %193 = vector.extract_strided_slice %191 {offsets = [0, 0], sizes = [8, 32], strides = [1, 1]} : vector<8x48xf32> to vector<8x32xf32>
    %194 = arith.addf %192, %193 : vector<8x32xf32>
    %195 = arith.addf %194, %14 : vector<8x32xf32>
    %196 = arith.negf %195 : vector<8x32xf32>
    %197 = math.exp %196 : vector<8x32xf32>
    %cst_49 = arith.constant 1.000000e+00 : f32
    %198 = vector.broadcast %cst_49 : f32 to vector<8x32xf32>
    %199 = arith.addf %198, %197 : vector<8x32xf32>
    %200 = arith.divf %198, %199 : vector<8x32xf32>
    %201 = vector.extract_strided_slice %200 {offsets = [0, 0], sizes = [8, 16], strides = [1, 1]} : vector<8x32xf32> to vector<8x16xf32>
    %202 = vector.extract_strided_slice %200 {offsets = [0, 16], sizes = [8, 16], strides = [1, 1]} : vector<8x32xf32> to vector<8x16xf32>
    %203 = vector.extract_strided_slice %190 {offsets = [0, 32], sizes = [8, 16], strides = [1, 1]} : vector<8x48xf32> to vector<8x16xf32>
    %204 = arith.addf %203, %17 : vector<8x16xf32>
    %205 = vector.extract_strided_slice %191 {offsets = [0, 32], sizes = [8, 16], strides = [1, 1]} : vector<8x48xf32> to vector<8x16xf32>
    %206 = arith.addf %205, %20 : vector<8x16xf32>
    %207 = arith.mulf %201, %206 : vector<8x16xf32>
    %208 = arith.addf %204, %207 : vector<8x16xf32>
    %209 = math.tanh %208 : vector<8x16xf32>
    %cst_50 = arith.constant 1.000000e+00 : f32
    %210 = vector.broadcast %cst_50 : f32 to vector<8x16xf32>
    %211 = arith.subf %210, %202 : vector<8x16xf32>
    %212 = arith.mulf %211, %209 : vector<8x16xf32>
    %213 = arith.mulf %202, %166 : vector<8x16xf32>
    %214 = arith.addf %212, %213 : vector<8x16xf32>
    %215 = vector.extract_strided_slice %5 {offsets = [32, 0], sizes = [8, 48], strides = [1, 1]} : vector<80x48xf32> to vector<8x48xf32>
    %cst_51 = arith.constant dense<0.000000e+00> : vector<8x48xf32>
    %216 = tpu.matmul %189, %6, %cst_51 {dimension_numbers = #tpu.dot_dimension_numbers<[1], [0], [0], [1], [0, 0, 1, 1], [], []>} : vector<8x16xf32>, vector<16x48xf32>, vector<8x48xf32> -> vector<8x48xf32>
    %217 = vector.extract_strided_slice %215 {offsets = [0, 0], sizes = [8, 32], strides = [1, 1]} : vector<8x48xf32> to vector<8x32xf32>
    %218 = vector.extract_strided_slice %216 {offsets = [0, 0], sizes = [8, 32], strides = [1, 1]} : vector<8x48xf32> to vector<8x32xf32>
    %219 = arith.addf %217, %218 : vector<8x32xf32>
    %220 = arith.negf %219 : vector<8x32xf32>
    %221 = math.exp %220 : vector<8x32xf32>
    %cst_52 = arith.constant 1.000000e+00 : f32
    %222 = vector.broadcast %cst_52 : f32 to vector<8x32xf32>
    %223 = arith.addf %222, %221 : vector<8x32xf32>
    %224 = arith.divf %222, %223 : vector<8x32xf32>
    %225 = vector.extract_strided_slice %224 {offsets = [0, 0], sizes = [8, 16], strides = [1, 1]} : vector<8x32xf32> to vector<8x16xf32>
    %226 = vector.extract_strided_slice %224 {offsets = [0, 16], sizes = [8, 16], strides = [1, 1]} : vector<8x32xf32> to vector<8x16xf32>
    %227 = vector.extract_strided_slice %215 {offsets = [0, 32], sizes = [8, 16], strides = [1, 1]} : vector<8x48xf32> to vector<8x16xf32>
    %228 = vector.extract_strided_slice %216 {offsets = [0, 32], sizes = [8, 16], strides = [1, 1]} : vector<8x48xf32> to vector<8x16xf32>
    %229 = arith.addf %228, %11 : vector<8x16xf32>
    %230 = arith.mulf %225, %229 : vector<8x16xf32>
    %231 = arith.addf %227, %230 : vector<8x16xf32>
    %232 = math.tanh %231 : vector<8x16xf32>
    %cst_53 = arith.constant 1.000000e+00 : f32
    %233 = vector.broadcast %cst_53 : f32 to vector<8x16xf32>
    %234 = arith.subf %233, %226 : vector<8x16xf32>
    %235 = arith.mulf %234, %232 : vector<8x16xf32>
    %236 = arith.mulf %226, %189 : vector<8x16xf32>
    %237 = arith.addf %235, %236 : vector<8x16xf32>
    %cst_54 = arith.constant dense<0.000000e+00> : vector<8x48xf32>
    %238 = tpu.matmul %237, %7, %cst_54 {dimension_numbers = #tpu.dot_dimension_numbers<[1], [0], [0], [1], [0, 0, 1, 1], [], []>} : vector<8x16xf32>, vector<16x48xf32>, vector<8x48xf32> -> vector<8x48xf32>
    %cst_55 = arith.constant dense<0.000000e+00> : vector<8x48xf32>
    %239 = tpu.matmul %214, %8, %cst_55 {dimension_numbers = #tpu.dot_dimension_numbers<[1], [0], [0], [1], [0, 0, 1, 1], [], []>} : vector<8x16xf32>, vector<16x48xf32>, vector<8x48xf32> -> vector<8x48xf32>
    %240 = vector.extract_strided_slice %238 {offsets = [0, 0], sizes = [8, 32], strides = [1, 1]} : vector<8x48xf32> to vector<8x32xf32>
    %241 = vector.extract_strided_slice %239 {offsets = [0, 0], sizes = [8, 32], strides = [1, 1]} : vector<8x48xf32> to vector<8x32xf32>
    %242 = arith.addf %240, %241 : vector<8x32xf32>
    %243 = arith.addf %242, %14 : vector<8x32xf32>
    %244 = arith.negf %243 : vector<8x32xf32>
    %245 = math.exp %244 : vector<8x32xf32>
    %cst_56 = arith.constant 1.000000e+00 : f32
    %246 = vector.broadcast %cst_56 : f32 to vector<8x32xf32>
    %247 = arith.addf %246, %245 : vector<8x32xf32>
    %248 = arith.divf %246, %247 : vector<8x32xf32>
    %249 = vector.extract_strided_slice %248 {offsets = [0, 0], sizes = [8, 16], strides = [1, 1]} : vector<8x32xf32> to vector<8x16xf32>
    %250 = vector.extract_strided_slice %248 {offsets = [0, 16], sizes = [8, 16], strides = [1, 1]} : vector<8x32xf32> to vector<8x16xf32>
    %251 = vector.extract_strided_slice %238 {offsets = [0, 32], sizes = [8, 16], strides = [1, 1]} : vector<8x48xf32> to vector<8x16xf32>
    %252 = arith.addf %251, %17 : vector<8x16xf32>
    %253 = vector.extract_strided_slice %239 {offsets = [0, 32], sizes = [8, 16], strides = [1, 1]} : vector<8x48xf32> to vector<8x16xf32>
    %254 = arith.addf %253, %20 : vector<8x16xf32>
    %255 = arith.mulf %249, %254 : vector<8x16xf32>
    %256 = arith.addf %252, %255 : vector<8x16xf32>
    %257 = math.tanh %256 : vector<8x16xf32>
    %cst_57 = arith.constant 1.000000e+00 : f32
    %258 = vector.broadcast %cst_57 : f32 to vector<8x16xf32>
    %259 = arith.subf %258, %250 : vector<8x16xf32>
    %260 = arith.mulf %259, %257 : vector<8x16xf32>
    %261 = arith.mulf %250, %214 : vector<8x16xf32>
    %262 = arith.addf %260, %261 : vector<8x16xf32>
    %263 = vector.extract_strided_slice %5 {offsets = [40, 0], sizes = [8, 48], strides = [1, 1]} : vector<80x48xf32> to vector<8x48xf32>
    %cst_58 = arith.constant dense<0.000000e+00> : vector<8x48xf32>
    %264 = tpu.matmul %237, %6, %cst_58 {dimension_numbers = #tpu.dot_dimension_numbers<[1], [0], [0], [1], [0, 0, 1, 1], [], []>} : vector<8x16xf32>, vector<16x48xf32>, vector<8x48xf32> -> vector<8x48xf32>
    %265 = vector.extract_strided_slice %263 {offsets = [0, 0], sizes = [8, 32], strides = [1, 1]} : vector<8x48xf32> to vector<8x32xf32>
    %266 = vector.extract_strided_slice %264 {offsets = [0, 0], sizes = [8, 32], strides = [1, 1]} : vector<8x48xf32> to vector<8x32xf32>
    %267 = arith.addf %265, %266 : vector<8x32xf32>
    %268 = arith.negf %267 : vector<8x32xf32>
    %269 = math.exp %268 : vector<8x32xf32>
    %cst_59 = arith.constant 1.000000e+00 : f32
    %270 = vector.broadcast %cst_59 : f32 to vector<8x32xf32>
    %271 = arith.addf %270, %269 : vector<8x32xf32>
    %272 = arith.divf %270, %271 : vector<8x32xf32>
    %273 = vector.extract_strided_slice %272 {offsets = [0, 0], sizes = [8, 16], strides = [1, 1]} : vector<8x32xf32> to vector<8x16xf32>
    %274 = vector.extract_strided_slice %272 {offsets = [0, 16], sizes = [8, 16], strides = [1, 1]} : vector<8x32xf32> to vector<8x16xf32>
    %275 = vector.extract_strided_slice %263 {offsets = [0, 32], sizes = [8, 16], strides = [1, 1]} : vector<8x48xf32> to vector<8x16xf32>
    %276 = vector.extract_strided_slice %264 {offsets = [0, 32], sizes = [8, 16], strides = [1, 1]} : vector<8x48xf32> to vector<8x16xf32>
    %277 = arith.addf %276, %11 : vector<8x16xf32>
    %278 = arith.mulf %273, %277 : vector<8x16xf32>
    %279 = arith.addf %275, %278 : vector<8x16xf32>
    %280 = math.tanh %279 : vector<8x16xf32>
    %cst_60 = arith.constant 1.000000e+00 : f32
    %281 = vector.broadcast %cst_60 : f32 to vector<8x16xf32>
    %282 = arith.subf %281, %274 : vector<8x16xf32>
    %283 = arith.mulf %282, %280 : vector<8x16xf32>
    %284 = arith.mulf %274, %237 : vector<8x16xf32>
    %285 = arith.addf %283, %284 : vector<8x16xf32>
    %cst_61 = arith.constant dense<0.000000e+00> : vector<8x48xf32>
    %286 = tpu.matmul %285, %7, %cst_61 {dimension_numbers = #tpu.dot_dimension_numbers<[1], [0], [0], [1], [0, 0, 1, 1], [], []>} : vector<8x16xf32>, vector<16x48xf32>, vector<8x48xf32> -> vector<8x48xf32>
    %cst_62 = arith.constant dense<0.000000e+00> : vector<8x48xf32>
    %287 = tpu.matmul %262, %8, %cst_62 {dimension_numbers = #tpu.dot_dimension_numbers<[1], [0], [0], [1], [0, 0, 1, 1], [], []>} : vector<8x16xf32>, vector<16x48xf32>, vector<8x48xf32> -> vector<8x48xf32>
    %288 = vector.extract_strided_slice %286 {offsets = [0, 0], sizes = [8, 32], strides = [1, 1]} : vector<8x48xf32> to vector<8x32xf32>
    %289 = vector.extract_strided_slice %287 {offsets = [0, 0], sizes = [8, 32], strides = [1, 1]} : vector<8x48xf32> to vector<8x32xf32>
    %290 = arith.addf %288, %289 : vector<8x32xf32>
    %291 = arith.addf %290, %14 : vector<8x32xf32>
    %292 = arith.negf %291 : vector<8x32xf32>
    %293 = math.exp %292 : vector<8x32xf32>
    %cst_63 = arith.constant 1.000000e+00 : f32
    %294 = vector.broadcast %cst_63 : f32 to vector<8x32xf32>
    %295 = arith.addf %294, %293 : vector<8x32xf32>
    %296 = arith.divf %294, %295 : vector<8x32xf32>
    %297 = vector.extract_strided_slice %296 {offsets = [0, 0], sizes = [8, 16], strides = [1, 1]} : vector<8x32xf32> to vector<8x16xf32>
    %298 = vector.extract_strided_slice %296 {offsets = [0, 16], sizes = [8, 16], strides = [1, 1]} : vector<8x32xf32> to vector<8x16xf32>
    %299 = vector.extract_strided_slice %286 {offsets = [0, 32], sizes = [8, 16], strides = [1, 1]} : vector<8x48xf32> to vector<8x16xf32>
    %300 = arith.addf %299, %17 : vector<8x16xf32>
    %301 = vector.extract_strided_slice %287 {offsets = [0, 32], sizes = [8, 16], strides = [1, 1]} : vector<8x48xf32> to vector<8x16xf32>
    %302 = arith.addf %301, %20 : vector<8x16xf32>
    %303 = arith.mulf %297, %302 : vector<8x16xf32>
    %304 = arith.addf %300, %303 : vector<8x16xf32>
    %305 = math.tanh %304 : vector<8x16xf32>
    %cst_64 = arith.constant 1.000000e+00 : f32
    %306 = vector.broadcast %cst_64 : f32 to vector<8x16xf32>
    %307 = arith.subf %306, %298 : vector<8x16xf32>
    %308 = arith.mulf %307, %305 : vector<8x16xf32>
    %309 = arith.mulf %298, %262 : vector<8x16xf32>
    %310 = arith.addf %308, %309 : vector<8x16xf32>
    %311 = vector.extract_strided_slice %5 {offsets = [48, 0], sizes = [8, 48], strides = [1, 1]} : vector<80x48xf32> to vector<8x48xf32>
    %cst_65 = arith.constant dense<0.000000e+00> : vector<8x48xf32>
    %312 = tpu.matmul %285, %6, %cst_65 {dimension_numbers = #tpu.dot_dimension_numbers<[1], [0], [0], [1], [0, 0, 1, 1], [], []>} : vector<8x16xf32>, vector<16x48xf32>, vector<8x48xf32> -> vector<8x48xf32>
    %313 = vector.extract_strided_slice %311 {offsets = [0, 0], sizes = [8, 32], strides = [1, 1]} : vector<8x48xf32> to vector<8x32xf32>
    %314 = vector.extract_strided_slice %312 {offsets = [0, 0], sizes = [8, 32], strides = [1, 1]} : vector<8x48xf32> to vector<8x32xf32>
    %315 = arith.addf %313, %314 : vector<8x32xf32>
    %316 = arith.negf %315 : vector<8x32xf32>
    %317 = math.exp %316 : vector<8x32xf32>
    %cst_66 = arith.constant 1.000000e+00 : f32
    %318 = vector.broadcast %cst_66 : f32 to vector<8x32xf32>
    %319 = arith.addf %318, %317 : vector<8x32xf32>
    %320 = arith.divf %318, %319 : vector<8x32xf32>
    %321 = vector.extract_strided_slice %320 {offsets = [0, 0], sizes = [8, 16], strides = [1, 1]} : vector<8x32xf32> to vector<8x16xf32>
    %322 = vector.extract_strided_slice %320 {offsets = [0, 16], sizes = [8, 16], strides = [1, 1]} : vector<8x32xf32> to vector<8x16xf32>
    %323 = vector.extract_strided_slice %311 {offsets = [0, 32], sizes = [8, 16], strides = [1, 1]} : vector<8x48xf32> to vector<8x16xf32>
    %324 = vector.extract_strided_slice %312 {offsets = [0, 32], sizes = [8, 16], strides = [1, 1]} : vector<8x48xf32> to vector<8x16xf32>
    %325 = arith.addf %324, %11 : vector<8x16xf32>
    %326 = arith.mulf %321, %325 : vector<8x16xf32>
    %327 = arith.addf %323, %326 : vector<8x16xf32>
    %328 = math.tanh %327 : vector<8x16xf32>
    %cst_67 = arith.constant 1.000000e+00 : f32
    %329 = vector.broadcast %cst_67 : f32 to vector<8x16xf32>
    %330 = arith.subf %329, %322 : vector<8x16xf32>
    %331 = arith.mulf %330, %328 : vector<8x16xf32>
    %332 = arith.mulf %322, %285 : vector<8x16xf32>
    %333 = arith.addf %331, %332 : vector<8x16xf32>
    %cst_68 = arith.constant dense<0.000000e+00> : vector<8x48xf32>
    %334 = tpu.matmul %333, %7, %cst_68 {dimension_numbers = #tpu.dot_dimension_numbers<[1], [0], [0], [1], [0, 0, 1, 1], [], []>} : vector<8x16xf32>, vector<16x48xf32>, vector<8x48xf32> -> vector<8x48xf32>
    %cst_69 = arith.constant dense<0.000000e+00> : vector<8x48xf32>
    %335 = tpu.matmul %310, %8, %cst_69 {dimension_numbers = #tpu.dot_dimension_numbers<[1], [0], [0], [1], [0, 0, 1, 1], [], []>} : vector<8x16xf32>, vector<16x48xf32>, vector<8x48xf32> -> vector<8x48xf32>
    %336 = vector.extract_strided_slice %334 {offsets = [0, 0], sizes = [8, 32], strides = [1, 1]} : vector<8x48xf32> to vector<8x32xf32>
    %337 = vector.extract_strided_slice %335 {offsets = [0, 0], sizes = [8, 32], strides = [1, 1]} : vector<8x48xf32> to vector<8x32xf32>
    %338 = arith.addf %336, %337 : vector<8x32xf32>
    %339 = arith.addf %338, %14 : vector<8x32xf32>
    %340 = arith.negf %339 : vector<8x32xf32>
    %341 = math.exp %340 : vector<8x32xf32>
    %cst_70 = arith.constant 1.000000e+00 : f32
    %342 = vector.broadcast %cst_70 : f32 to vector<8x32xf32>
    %343 = arith.addf %342, %341 : vector<8x32xf32>
    %344 = arith.divf %342, %343 : vector<8x32xf32>
    %345 = vector.extract_strided_slice %344 {offsets = [0, 0], sizes = [8, 16], strides = [1, 1]} : vector<8x32xf32> to vector<8x16xf32>
    %346 = vector.extract_strided_slice %344 {offsets = [0, 16], sizes = [8, 16], strides = [1, 1]} : vector<8x32xf32> to vector<8x16xf32>
    %347 = vector.extract_strided_slice %334 {offsets = [0, 32], sizes = [8, 16], strides = [1, 1]} : vector<8x48xf32> to vector<8x16xf32>
    %348 = arith.addf %347, %17 : vector<8x16xf32>
    %349 = vector.extract_strided_slice %335 {offsets = [0, 32], sizes = [8, 16], strides = [1, 1]} : vector<8x48xf32> to vector<8x16xf32>
    %350 = arith.addf %349, %20 : vector<8x16xf32>
    %351 = arith.mulf %345, %350 : vector<8x16xf32>
    %352 = arith.addf %348, %351 : vector<8x16xf32>
    %353 = math.tanh %352 : vector<8x16xf32>
    %cst_71 = arith.constant 1.000000e+00 : f32
    %354 = vector.broadcast %cst_71 : f32 to vector<8x16xf32>
    %355 = arith.subf %354, %346 : vector<8x16xf32>
    %356 = arith.mulf %355, %353 : vector<8x16xf32>
    %357 = arith.mulf %346, %310 : vector<8x16xf32>
    %358 = arith.addf %356, %357 : vector<8x16xf32>
    %359 = vector.extract_strided_slice %5 {offsets = [56, 0], sizes = [8, 48], strides = [1, 1]} : vector<80x48xf32> to vector<8x48xf32>
    %cst_72 = arith.constant dense<0.000000e+00> : vector<8x48xf32>
    %360 = tpu.matmul %333, %6, %cst_72 {dimension_numbers = #tpu.dot_dimension_numbers<[1], [0], [0], [1], [0, 0, 1, 1], [], []>} : vector<8x16xf32>, vector<16x48xf32>, vector<8x48xf32> -> vector<8x48xf32>
    %361 = vector.extract_strided_slice %359 {offsets = [0, 0], sizes = [8, 32], strides = [1, 1]} : vector<8x48xf32> to vector<8x32xf32>
    %362 = vector.extract_strided_slice %360 {offsets = [0, 0], sizes = [8, 32], strides = [1, 1]} : vector<8x48xf32> to vector<8x32xf32>
    %363 = arith.addf %361, %362 : vector<8x32xf32>
    %364 = arith.negf %363 : vector<8x32xf32>
    %365 = math.exp %364 : vector<8x32xf32>
    %cst_73 = arith.constant 1.000000e+00 : f32
    %366 = vector.broadcast %cst_73 : f32 to vector<8x32xf32>
    %367 = arith.addf %366, %365 : vector<8x32xf32>
    %368 = arith.divf %366, %367 : vector<8x32xf32>
    %369 = vector.extract_strided_slice %368 {offsets = [0, 0], sizes = [8, 16], strides = [1, 1]} : vector<8x32xf32> to vector<8x16xf32>
    %370 = vector.extract_strided_slice %368 {offsets = [0, 16], sizes = [8, 16], strides = [1, 1]} : vector<8x32xf32> to vector<8x16xf32>
    %371 = vector.extract_strided_slice %359 {offsets = [0, 32], sizes = [8, 16], strides = [1, 1]} : vector<8x48xf32> to vector<8x16xf32>
    %372 = vector.extract_strided_slice %360 {offsets = [0, 32], sizes = [8, 16], strides = [1, 1]} : vector<8x48xf32> to vector<8x16xf32>
    %373 = arith.addf %372, %11 : vector<8x16xf32>
    %374 = arith.mulf %369, %373 : vector<8x16xf32>
    %375 = arith.addf %371, %374 : vector<8x16xf32>
    %376 = math.tanh %375 : vector<8x16xf32>
    %cst_74 = arith.constant 1.000000e+00 : f32
    %377 = vector.broadcast %cst_74 : f32 to vector<8x16xf32>
    %378 = arith.subf %377, %370 : vector<8x16xf32>
    %379 = arith.mulf %378, %376 : vector<8x16xf32>
    %380 = arith.mulf %370, %333 : vector<8x16xf32>
    %381 = arith.addf %379, %380 : vector<8x16xf32>
    %cst_75 = arith.constant dense<0.000000e+00> : vector<8x48xf32>
    %382 = tpu.matmul %381, %7, %cst_75 {dimension_numbers = #tpu.dot_dimension_numbers<[1], [0], [0], [1], [0, 0, 1, 1], [], []>} : vector<8x16xf32>, vector<16x48xf32>, vector<8x48xf32> -> vector<8x48xf32>
    %cst_76 = arith.constant dense<0.000000e+00> : vector<8x48xf32>
    %383 = tpu.matmul %358, %8, %cst_76 {dimension_numbers = #tpu.dot_dimension_numbers<[1], [0], [0], [1], [0, 0, 1, 1], [], []>} : vector<8x16xf32>, vector<16x48xf32>, vector<8x48xf32> -> vector<8x48xf32>
    %384 = vector.extract_strided_slice %382 {offsets = [0, 0], sizes = [8, 32], strides = [1, 1]} : vector<8x48xf32> to vector<8x32xf32>
    %385 = vector.extract_strided_slice %383 {offsets = [0, 0], sizes = [8, 32], strides = [1, 1]} : vector<8x48xf32> to vector<8x32xf32>
    %386 = arith.addf %384, %385 : vector<8x32xf32>
    %387 = arith.addf %386, %14 : vector<8x32xf32>
    %388 = arith.negf %387 : vector<8x32xf32>
    %389 = math.exp %388 : vector<8x32xf32>
    %cst_77 = arith.constant 1.000000e+00 : f32
    %390 = vector.broadcast %cst_77 : f32 to vector<8x32xf32>
    %391 = arith.addf %390, %389 : vector<8x32xf32>
    %392 = arith.divf %390, %391 : vector<8x32xf32>
    %393 = vector.extract_strided_slice %392 {offsets = [0, 0], sizes = [8, 16], strides = [1, 1]} : vector<8x32xf32> to vector<8x16xf32>
    %394 = vector.extract_strided_slice %392 {offsets = [0, 16], sizes = [8, 16], strides = [1, 1]} : vector<8x32xf32> to vector<8x16xf32>
    %395 = vector.extract_strided_slice %382 {offsets = [0, 32], sizes = [8, 16], strides = [1, 1]} : vector<8x48xf32> to vector<8x16xf32>
    %396 = arith.addf %395, %17 : vector<8x16xf32>
    %397 = vector.extract_strided_slice %383 {offsets = [0, 32], sizes = [8, 16], strides = [1, 1]} : vector<8x48xf32> to vector<8x16xf32>
    %398 = arith.addf %397, %20 : vector<8x16xf32>
    %399 = arith.mulf %393, %398 : vector<8x16xf32>
    %400 = arith.addf %396, %399 : vector<8x16xf32>
    %401 = math.tanh %400 : vector<8x16xf32>
    %cst_78 = arith.constant 1.000000e+00 : f32
    %402 = vector.broadcast %cst_78 : f32 to vector<8x16xf32>
    %403 = arith.subf %402, %394 : vector<8x16xf32>
    %404 = arith.mulf %403, %401 : vector<8x16xf32>
    %405 = arith.mulf %394, %358 : vector<8x16xf32>
    %406 = arith.addf %404, %405 : vector<8x16xf32>
    %407 = vector.extract_strided_slice %5 {offsets = [64, 0], sizes = [8, 48], strides = [1, 1]} : vector<80x48xf32> to vector<8x48xf32>
    %cst_79 = arith.constant dense<0.000000e+00> : vector<8x48xf32>
    %408 = tpu.matmul %381, %6, %cst_79 {dimension_numbers = #tpu.dot_dimension_numbers<[1], [0], [0], [1], [0, 0, 1, 1], [], []>} : vector<8x16xf32>, vector<16x48xf32>, vector<8x48xf32> -> vector<8x48xf32>
    %409 = vector.extract_strided_slice %407 {offsets = [0, 0], sizes = [8, 32], strides = [1, 1]} : vector<8x48xf32> to vector<8x32xf32>
    %410 = vector.extract_strided_slice %408 {offsets = [0, 0], sizes = [8, 32], strides = [1, 1]} : vector<8x48xf32> to vector<8x32xf32>
    %411 = arith.addf %409, %410 : vector<8x32xf32>
    %412 = arith.negf %411 : vector<8x32xf32>
    %413 = math.exp %412 : vector<8x32xf32>
    %cst_80 = arith.constant 1.000000e+00 : f32
    %414 = vector.broadcast %cst_80 : f32 to vector<8x32xf32>
    %415 = arith.addf %414, %413 : vector<8x32xf32>
    %416 = arith.divf %414, %415 : vector<8x32xf32>
    %417 = vector.extract_strided_slice %416 {offsets = [0, 0], sizes = [8, 16], strides = [1, 1]} : vector<8x32xf32> to vector<8x16xf32>
    %418 = vector.extract_strided_slice %416 {offsets = [0, 16], sizes = [8, 16], strides = [1, 1]} : vector<8x32xf32> to vector<8x16xf32>
    %419 = vector.extract_strided_slice %407 {offsets = [0, 32], sizes = [8, 16], strides = [1, 1]} : vector<8x48xf32> to vector<8x16xf32>
    %420 = vector.extract_strided_slice %408 {offsets = [0, 32], sizes = [8, 16], strides = [1, 1]} : vector<8x48xf32> to vector<8x16xf32>
    %421 = arith.addf %420, %11 : vector<8x16xf32>
    %422 = arith.mulf %417, %421 : vector<8x16xf32>
    %423 = arith.addf %419, %422 : vector<8x16xf32>
    %424 = math.tanh %423 : vector<8x16xf32>
    %cst_81 = arith.constant 1.000000e+00 : f32
    %425 = vector.broadcast %cst_81 : f32 to vector<8x16xf32>
    %426 = arith.subf %425, %418 : vector<8x16xf32>
    %427 = arith.mulf %426, %424 : vector<8x16xf32>
    %428 = arith.mulf %418, %381 : vector<8x16xf32>
    %429 = arith.addf %427, %428 : vector<8x16xf32>
    %cst_82 = arith.constant dense<0.000000e+00> : vector<8x48xf32>
    %430 = tpu.matmul %429, %7, %cst_82 {dimension_numbers = #tpu.dot_dimension_numbers<[1], [0], [0], [1], [0, 0, 1, 1], [], []>} : vector<8x16xf32>, vector<16x48xf32>, vector<8x48xf32> -> vector<8x48xf32>
    %cst_83 = arith.constant dense<0.000000e+00> : vector<8x48xf32>
    %431 = tpu.matmul %406, %8, %cst_83 {dimension_numbers = #tpu.dot_dimension_numbers<[1], [0], [0], [1], [0, 0, 1, 1], [], []>} : vector<8x16xf32>, vector<16x48xf32>, vector<8x48xf32> -> vector<8x48xf32>
    %432 = vector.extract_strided_slice %430 {offsets = [0, 0], sizes = [8, 32], strides = [1, 1]} : vector<8x48xf32> to vector<8x32xf32>
    %433 = vector.extract_strided_slice %431 {offsets = [0, 0], sizes = [8, 32], strides = [1, 1]} : vector<8x48xf32> to vector<8x32xf32>
    %434 = arith.addf %432, %433 : vector<8x32xf32>
    %435 = arith.addf %434, %14 : vector<8x32xf32>
    %436 = arith.negf %435 : vector<8x32xf32>
    %437 = math.exp %436 : vector<8x32xf32>
    %cst_84 = arith.constant 1.000000e+00 : f32
    %438 = vector.broadcast %cst_84 : f32 to vector<8x32xf32>
    %439 = arith.addf %438, %437 : vector<8x32xf32>
    %440 = arith.divf %438, %439 : vector<8x32xf32>
    %441 = vector.extract_strided_slice %440 {offsets = [0, 0], sizes = [8, 16], strides = [1, 1]} : vector<8x32xf32> to vector<8x16xf32>
    %442 = vector.extract_strided_slice %440 {offsets = [0, 16], sizes = [8, 16], strides = [1, 1]} : vector<8x32xf32> to vector<8x16xf32>
    %443 = vector.extract_strided_slice %430 {offsets = [0, 32], sizes = [8, 16], strides = [1, 1]} : vector<8x48xf32> to vector<8x16xf32>
    %444 = arith.addf %443, %17 : vector<8x16xf32>
    %445 = vector.extract_strided_slice %431 {offsets = [0, 32], sizes = [8, 16], strides = [1, 1]} : vector<8x48xf32> to vector<8x16xf32>
    %446 = arith.addf %445, %20 : vector<8x16xf32>
    %447 = arith.mulf %441, %446 : vector<8x16xf32>
    %448 = arith.addf %444, %447 : vector<8x16xf32>
    %449 = math.tanh %448 : vector<8x16xf32>
    %cst_85 = arith.constant 1.000000e+00 : f32
    %450 = vector.broadcast %cst_85 : f32 to vector<8x16xf32>
    %451 = arith.subf %450, %442 : vector<8x16xf32>
    %452 = arith.mulf %451, %449 : vector<8x16xf32>
    %453 = arith.mulf %442, %406 : vector<8x16xf32>
    %454 = arith.addf %452, %453 : vector<8x16xf32>
    %455 = vector.extract_strided_slice %5 {offsets = [72, 0], sizes = [8, 48], strides = [1, 1]} : vector<80x48xf32> to vector<8x48xf32>
    %cst_86 = arith.constant dense<0.000000e+00> : vector<8x48xf32>
    %456 = tpu.matmul %429, %6, %cst_86 {dimension_numbers = #tpu.dot_dimension_numbers<[1], [0], [0], [1], [0, 0, 1, 1], [], []>} : vector<8x16xf32>, vector<16x48xf32>, vector<8x48xf32> -> vector<8x48xf32>
    %457 = vector.extract_strided_slice %455 {offsets = [0, 0], sizes = [8, 32], strides = [1, 1]} : vector<8x48xf32> to vector<8x32xf32>
    %458 = vector.extract_strided_slice %456 {offsets = [0, 0], sizes = [8, 32], strides = [1, 1]} : vector<8x48xf32> to vector<8x32xf32>
    %459 = arith.addf %457, %458 : vector<8x32xf32>
    %460 = arith.negf %459 : vector<8x32xf32>
    %461 = math.exp %460 : vector<8x32xf32>
    %cst_87 = arith.constant 1.000000e+00 : f32
    %462 = vector.broadcast %cst_87 : f32 to vector<8x32xf32>
    %463 = arith.addf %462, %461 : vector<8x32xf32>
    %464 = arith.divf %462, %463 : vector<8x32xf32>
    %465 = vector.extract_strided_slice %464 {offsets = [0, 0], sizes = [8, 16], strides = [1, 1]} : vector<8x32xf32> to vector<8x16xf32>
    %466 = vector.extract_strided_slice %464 {offsets = [0, 16], sizes = [8, 16], strides = [1, 1]} : vector<8x32xf32> to vector<8x16xf32>
    %467 = vector.extract_strided_slice %455 {offsets = [0, 32], sizes = [8, 16], strides = [1, 1]} : vector<8x48xf32> to vector<8x16xf32>
    %468 = vector.extract_strided_slice %456 {offsets = [0, 32], sizes = [8, 16], strides = [1, 1]} : vector<8x48xf32> to vector<8x16xf32>
    %469 = arith.addf %468, %11 : vector<8x16xf32>
    %470 = arith.mulf %465, %469 : vector<8x16xf32>
    %471 = arith.addf %467, %470 : vector<8x16xf32>
    %472 = math.tanh %471 : vector<8x16xf32>
    %cst_88 = arith.constant 1.000000e+00 : f32
    %473 = vector.broadcast %cst_88 : f32 to vector<8x16xf32>
    %474 = arith.subf %473, %466 : vector<8x16xf32>
    %475 = arith.mulf %474, %472 : vector<8x16xf32>
    %476 = arith.mulf %466, %429 : vector<8x16xf32>
    %477 = arith.addf %475, %476 : vector<8x16xf32>
    %cst_89 = arith.constant dense<0.000000e+00> : vector<8x48xf32>
    %478 = tpu.matmul %477, %7, %cst_89 {dimension_numbers = #tpu.dot_dimension_numbers<[1], [0], [0], [1], [0, 0, 1, 1], [], []>} : vector<8x16xf32>, vector<16x48xf32>, vector<8x48xf32> -> vector<8x48xf32>
    %cst_90 = arith.constant dense<0.000000e+00> : vector<8x48xf32>
    %479 = tpu.matmul %454, %8, %cst_90 {dimension_numbers = #tpu.dot_dimension_numbers<[1], [0], [0], [1], [0, 0, 1, 1], [], []>} : vector<8x16xf32>, vector<16x48xf32>, vector<8x48xf32> -> vector<8x48xf32>
    %480 = vector.extract_strided_slice %478 {offsets = [0, 0], sizes = [8, 32], strides = [1, 1]} : vector<8x48xf32> to vector<8x32xf32>
    %481 = vector.extract_strided_slice %479 {offsets = [0, 0], sizes = [8, 32], strides = [1, 1]} : vector<8x48xf32> to vector<8x32xf32>
    %482 = arith.addf %480, %481 : vector<8x32xf32>
    %483 = arith.addf %482, %14 : vector<8x32xf32>
    %484 = arith.negf %483 : vector<8x32xf32>
    %485 = math.exp %484 : vector<8x32xf32>
    %cst_91 = arith.constant 1.000000e+00 : f32
    %486 = vector.broadcast %cst_91 : f32 to vector<8x32xf32>
    %487 = arith.addf %486, %485 : vector<8x32xf32>
    %488 = arith.divf %486, %487 : vector<8x32xf32>
    %489 = vector.extract_strided_slice %488 {offsets = [0, 0], sizes = [8, 16], strides = [1, 1]} : vector<8x32xf32> to vector<8x16xf32>
    %490 = vector.extract_strided_slice %488 {offsets = [0, 16], sizes = [8, 16], strides = [1, 1]} : vector<8x32xf32> to vector<8x16xf32>
    %491 = vector.extract_strided_slice %478 {offsets = [0, 32], sizes = [8, 16], strides = [1, 1]} : vector<8x48xf32> to vector<8x16xf32>
    %492 = arith.addf %491, %17 : vector<8x16xf32>
    %493 = vector.extract_strided_slice %479 {offsets = [0, 32], sizes = [8, 16], strides = [1, 1]} : vector<8x48xf32> to vector<8x16xf32>
    %494 = arith.addf %493, %20 : vector<8x16xf32>
    %495 = arith.mulf %489, %494 : vector<8x16xf32>
    %496 = arith.addf %492, %495 : vector<8x16xf32>
    %497 = math.tanh %496 : vector<8x16xf32>
    %cst_92 = arith.constant 1.000000e+00 : f32
    %498 = vector.broadcast %cst_92 : f32 to vector<8x16xf32>
    %499 = arith.subf %498, %490 : vector<8x16xf32>
    %500 = arith.mulf %499, %497 : vector<8x16xf32>
    %501 = arith.mulf %490, %454 : vector<8x16xf32>
    %502 = arith.addf %500, %501 : vector<8x16xf32>
    %503 = tpu.concatenate %70, %118, %166, %214, %262, %310, %358, %406, %454, %502 in 0 : vector<8x16xf32>, vector<8x16xf32>, vector<8x16xf32>, vector<8x16xf32>, vector<8x16xf32>, vector<8x16xf32>, vector<8x16xf32>, vector<8x16xf32>, vector<8x16xf32>, vector<8x16xf32> -> vector<80x16xf32>
    %c0_93 = arith.constant 0 : index
    %c0_94 = arith.constant 0 : index
    %504 = vector.load %arg12[%c0_93, %c0_94] : memref<16x6xf32, #tpu.memory_space<vmem>>, vector<16x6xf32>
    %cst_95 = arith.constant dense<0.000000e+00> : vector<80x6xf32>
    %505 = tpu.matmul %503, %504, %cst_95 {dimension_numbers = #tpu.dot_dimension_numbers<[1], [0], [0], [1], [0, 0, 1, 1], [], []>} : vector<80x16xf32>, vector<16x6xf32>, vector<80x6xf32> -> vector<80x6xf32>
    %c0_96 = arith.constant 0 : index
    %c0_97 = arith.constant 0 : index
    %506 = vector.load %arg13[%c0_96, %c0_97] : memref<1x6xf32, #tpu.memory_space<vmem>>, vector<1x6xf32>
    %507 = vector.broadcast %506 : vector<1x6xf32> to vector<80x6xf32>
    %508 = arith.addf %505, %507 : vector<80x6xf32>
    %c0_98 = arith.constant 0 : index
    %c0_99 = arith.constant 0 : index
    %509 = vector.load %arg14[%c0_98, %c0_99] : memref<80x6xf32, #tpu.memory_space<vmem>>, vector<80x6xf32>
    tpu.vector_store %arg14[%c0_98, %c0_99], %508 {strides = array<i32>} : memref<80x6xf32, #tpu.memory_space<vmem>>, vector<80x6xf32>,
    %c0_100 = arith.constant 0 : index
    %c0_101 = arith.constant 0 : index
    %510 = vector.load %arg15[%c0_100, %c0_101] : memref<8x16xf32, #tpu.memory_space<vmem>>, vector<8x16xf32>
    tpu.vector_store %arg15[%c0_100, %c0_101], %477 {strides = array<i32>} : memref<8x16xf32, #tpu.memory_space<vmem>>, vector<8x16xf32>,
    %c0_102 = arith.constant 0 : index
    %c0_103 = arith.constant 0 : index
    %511 = vector.load %arg16[%c0_102, %c0_103] : memref<8x16xf32, #tpu.memory_space<vmem>>, vector<8x16xf32>
    tpu.vector_store %arg16[%c0_102, %c0_103], %502 {strides = array<i32>} : memref<8x16xf32, #tpu.memory_space<vmem>>, vector<8x16xf32>,
    return
  }
}

</mosaic_0001>

<llo_original>
// kernel: multi_regression_gru.1
$region0: #{multi_regression_gru.1}
  #allocation0 [shape = 'u32[]', space=smem, size = 0x4, offset = 0x4, fixed_abs, tag = 'smem constant byte address 0x4 - core index']
  #allocation1 [shape = 'u32[72,128]{1,0:T(1,128)}', space=vmem, size = 0x9000, scoped, tag = 'internal scratch']
  %s0 = inlined_call_operand.vmem [shape: f32[80,6], index: 0, kind: input, shape index: {}]
  %s1 = inlined_call_operand.vmem [shape: f32[8,16], index: 1, kind: input, shape index: {}]
  %s2 = inlined_call_operand.vmem [shape: f32[8,16], index: 2, kind: input, shape index: {}]
  %s3 = inlined_call_operand.vmem [shape: f32[6,48], index: 3, kind: input, shape index: {}]
  %s4 = inlined_call_operand.vmem [shape: f32[16,48], index: 4, kind: input, shape index: {}]
  %s5 = inlined_call_operand.vmem [shape: f32[1,48], index: 5, kind: input, shape index: {}]
  %s6 = inlined_call_operand.vmem [shape: f32[1,16], index: 6, kind: input, shape index: {}]
  %s7 = inlined_call_operand.vmem [shape: f32[16,48], index: 7, kind: input, shape index: {}]
  %s8 = inlined_call_operand.vmem [shape: f32[16,48], index: 8, kind: input, shape index: {}]
  %s9 = inlined_call_operand.vmem [shape: f32[1,32], index: 9, kind: input, shape index: {}]
  %s10 = inlined_call_operand.vmem [shape: f32[1,16], index: 10, kind: input, shape index: {}]
  %s11 = inlined_call_operand.vmem [shape: f32[1,16], index: 11, kind: input, shape index: {}]
  %s12 = inlined_call_operand.vmem [shape: f32[16,6], index: 12, kind: input, shape index: {}]
  %s13 = inlined_call_operand.vmem [shape: f32[1,6], index: 13, kind: input, shape index: {}]
  %s14 = inlined_call_operand.vmem [shape: f32[80,6], index: 14, kind: output, shape index: {0}]
  %s15 = inlined_call_operand.hbm [shape: f32[8,16], index: 15, kind: output, shape index: {1}]
  %s16 = inlined_call_operand.hbm [shape: f32[8,16], index: 16, kind: output, shape index: {2}]
  %17 = xla_tuple %s14, %s15, %s16
  %s18 = sld [smem:[#allocation0]]
  $region82: #{multi_regression_gru.1} parent=0
    _
  %s20 = ssub.s32 1, %s18
  %s21 = scalar_select 0, %s20, %s18
  $region1: #{multi_regression_gru.1} parent=0
    #allocation2 [shape = 'u8[4096]{0}', space=vmem, size = 0x1000, scoped, tag = 'output window, operand 1, single buffered']
    #allocation3 [shape = 's32[1]{0}', space=sflag, size = 0x4, scoped, tag = 'scoped memory for multi_regression_gru.1']
    #allocation4 [shape = 'u8[4096]{0}', space=vmem, size = 0x1000, scoped, tag = 'output window, operand 2, single buffered']
    #allocation5 [shape = 's32[1]{0}', space=sflag, size = 0x4, scoped, tag = 'scoped memory for multi_regression_gru.1']
    %22 = vsyncpa [#allocation3], 0
    %23 = vsyncpa [#allocation5], 0
    // Predicated region
    $region2: #{multi_regression_gru.1} parent=1 // pred_check
      _
    $region3: #{multi_regression_gru.1} parent=1 // pred_check_branch
      %25 = sbr.rel (0) target = $region5
    $region4: #{multi_regression_gru.1} parent=1 // pred_region
      _
    $region5: #{multi_regression_gru.1} parent=1 // pred_fallthru
      _
    // Predicated region
    $region6: #{multi_regression_gru.1} parent=1 // pred_check
      _
    $region7: #{multi_regression_gru.1} parent=1 // pred_check_branch
      %27 = sbr.rel (0) target = $region9
    $region8: #{multi_regression_gru.1} parent=1 // pred_region
      _
    $region9: #{multi_regression_gru.1} parent=1 // pred_fallthru
      _
    // Predicated region
    $region10: #{multi_regression_gru.1} parent=1 // pred_check
      _
    $region11: #{multi_regression_gru.1} parent=1 // pred_check_branch
      %29 = sbr.rel (0) target = $region13
    $region12: #{multi_regression_gru.1} parent=1 // pred_region
      _
    $region13: #{multi_regression_gru.1} parent=1 // pred_fallthru
      _
    // Predicated region
    $region14: #{multi_regression_gru.1} parent=1 // pred_check
      _
    $region15: #{multi_regression_gru.1} parent=1 // pred_check_branch
      %31 = sbr.rel (0) target = $region17
    $region16: #{multi_regression_gru.1} parent=1 // pred_region
      _
    $region17: #{multi_regression_gru.1} parent=1 // pred_fallthru
      _
    // Predicated region
    $region18: #{multi_regression_gru.1} parent=1 // pred_check
      _
    $region19: #{multi_regression_gru.1} parent=1 // pred_check_branch
      %33 = sbr.rel (0) target = $region21
    $region20: #{multi_regression_gru.1} parent=1 // pred_region
      _
    $region21: #{multi_regression_gru.1} parent=1 // pred_fallthru
      _
    // Predicated region
    $region22: #{multi_regression_gru.1} parent=1 // pred_check
      _
    $region23: #{multi_regression_gru.1} parent=1 // pred_check_branch
      %35 = sbr.rel (0) target = $region25
    $region24: #{multi_regression_gru.1} parent=1 // pred_region
      _
    $region25: #{multi_regression_gru.1} parent=1 // pred_fallthru
      _
    // Predicated region
    $region26: #{multi_regression_gru.1} parent=1 // pred_check
      _
    $region27: #{multi_regression_gru.1} parent=1 // pred_check_branch
      %37 = sbr.rel (0) target = $region29
    $region28: #{multi_regression_gru.1} parent=1 // pred_region
      _
    $region29: #{multi_regression_gru.1} parent=1 // pred_fallthru
      _
    // Predicated region
    $region30: #{multi_regression_gru.1} parent=1 // pred_check
      _
    $region31: #{multi_regression_gru.1} parent=1 // pred_check_branch
      %39 = sbr.rel (0) target = $region33
    $region32: #{multi_regression_gru.1} parent=1 // pred_region
      _
    $region33: #{multi_regression_gru.1} parent=1 // pred_fallthru
      _
    // Predicated region
    $region34: #{multi_regression_gru.1} parent=1 // pred_check
      _
    $region35: #{multi_regression_gru.1} parent=1 // pred_check_branch
      %41 = sbr.rel (0) target = $region37
    $region36: #{multi_regression_gru.1} parent=1 // pred_region
      _
    $region37: #{multi_regression_gru.1} parent=1 // pred_fallthru
      _
    // Predicated region
    $region38: #{multi_regression_gru.1} parent=1 // pred_check
      _
    $region39: #{multi_regression_gru.1} parent=1 // pred_check_branch
      %43 = sbr.rel (0) target = $region41
    $region40: #{multi_regression_gru.1} parent=1 // pred_region
      _
    $region41: #{multi_regression_gru.1} parent=1 // pred_fallthru
      _
    // Predicated region
    $region42: #{multi_regression_gru.1} parent=1 // pred_check
      _
    $region43: #{multi_regression_gru.1} parent=1 // pred_check_branch
      %45 = sbr.rel (0) target = $region45
    $region44: #{multi_regression_gru.1} parent=1 // pred_region
      _
    $region45: #{multi_regression_gru.1} parent=1 // pred_fallthru
      _
    // Predicated region
    $region46: #{multi_regression_gru.1} parent=1 // pred_check
      _
    $region47: #{multi_regression_gru.1} parent=1 // pred_check_branch
      %47 = sbr.rel (0) target = $region49
    $region48: #{multi_regression_gru.1} parent=1 // pred_region
      _
    $region49: #{multi_regression_gru.1} parent=1 // pred_fallthru
      _
    // Predicated region
    $region50: #{multi_regression_gru.1} parent=1 // pred_check
      _
    $region51: #{multi_regression_gru.1} parent=1 // pred_check_branch
      %49 = sbr.rel (0) target = $region53
    $region52: #{multi_regression_gru.1} parent=1 // pred_region
      _
    $region53: #{multi_regression_gru.1} parent=1 // pred_fallthru
      _
    // Predicated region
    $region54: #{multi_regression_gru.1} parent=1 // pred_check
      _
    $region55: #{multi_regression_gru.1} parent=1 // pred_check_branch
      %51 = sbr.rel (0) target = $region57
    $region56: #{multi_regression_gru.1} parent=1 // pred_region
      _
    $region57: #{multi_regression_gru.1} parent=1 // pred_fallthru
      _
    %v52 = vld [vmem:[%s0] sm:$0xff]
    %v53 = vld [vmem:[%s0 + $0x8] sm:$0xff]
    %v54 = vld [vmem:[%s0 + $0x10] sm:$0xff]
    %v55 = vld [vmem:[%s0 + $0x18] sm:$0xff]
    %v56 = vld [vmem:[%s0 + $0x20] sm:$0xff]
    %v57 = vld [vmem:[%s0 + $0x28] sm:$0xff]
    %v58 = vld [vmem:[%s0 + $0x30] sm:$0xff]
    %v59 = vld [vmem:[%s0 + $0x38] sm:$0xff]
    %v60 = vld [vmem:[%s0 + $0x40] sm:$0xff]
    %v61 = vld [vmem:[%s0 + $0x48] sm:$0xff]
    %v62 = vld [vmem:[%s3] sm:$0x3f]
    %v63 = vld [vmem:[%s5] sm:$0x1]
    %v65 = vperm.slane %v63, 0
    %vm67 = vcmask 48128
    %v69 = vsel %vm67, %v52, 0
    %v72 = vsel %vm67, %v53, 0
    %v75 = vsel %vm67, %v54, 0
    %v78 = vsel %vm67, %v55, 0
    %v81 = vsel %vm67, %v56, 0
    %v84 = vsel %vm67, %v57, 0
    %v87 = vsel %vm67, %v58, 0
    %v90 = vsel %vm67, %v59, 0
    %v93 = vsel %vm67, %v60, 0
    %v96 = vsel %vm67, %v61, 0
    %vm98 = vcmask 1045504
    %v100 = vsel %vm98, %v62, 0
    %102 = vmatpush.msra.mxu0 0.0
    %103 = vmatpush.msra.mxu0 0.0
    %104 = vmatpush.msra.mxu0 0.0
    %105 = vmatpush.msra.mxu0 0.0
    %106 = vmatpush.msra.mxu0 0.0
    %107 = vmatpush.msra.mxu0 0.0
    %108 = vmatpush.msra.mxu0 0.0
    %109 = vmatpush.msra.mxu0 0.0
    %110 = vmatpush.msra.mxu0 0.0
    %111 = vmatpush.msra.mxu0 0.0
    %112 = vmatpush.msra.mxu0 0.0
    %113 = vmatpush.msra.mxu0 0.0
    %114 = vmatpush.msra.mxu0 0.0
    %115 = vmatpush.msra.mxu0 0.0
    %116 = vmatpush.msra.mxu0 0.0
    %117 = vmatpush.msra.mxu0 %v100
    %118 = vmatmul.f32.gmra.mxu0 %v69
    %v119 = vpop.f32.mrf.mxu0
    %v120 = vadd.f32 %v65, %v119
    %121 = vmatmul.f32.gmra.mxu0 %v72
    %v122 = vpop.f32.mrf.mxu0
    %v123 = vadd.f32 %v65, %v122
    %124 = vmatmul.f32.gmra.mxu0 %v75
    %v125 = vpop.f32.mrf.mxu0
    %v126 = vadd.f32 %v65, %v125
    %127 = vmatmul.f32.gmra.mxu0 %v78
    %v128 = vpop.f32.mrf.mxu0
    %v129 = vadd.f32 %v65, %v128
    %130 = vmatmul.f32.gmra.mxu0 %v81
    %v131 = vpop.f32.mrf.mxu0
    %v132 = vadd.f32 %v65, %v131
    %133 = vmatmul.f32.gmra.mxu0 %v84
    %v134 = vpop.f32.mrf.mxu0
    %v135 = vadd.f32 %v65, %v134
    %136 = vmatmul.f32.gmra.mxu0 %v87
    %v137 = vpop.f32.mrf.mxu0
    %v138 = vadd.f32 %v65, %v137
    %139 = vmatmul.f32.gmra.mxu0 %v90
    %v140 = vpop.f32.mrf.mxu0
    %v141 = vadd.f32 %v65, %v140
    %142 = vmatmul.f32.gmra.mxu0 %v93
    %v143 = vpop.f32.mrf.mxu0
    %v144 = vadd.f32 %v65, %v143
    %145 = vmatmul.f32.gmra.mxu0 %v96
    %v146 = vpop.f32.mrf.mxu0
    %v147 = vadd.f32 %v65, %v146
    %148 = vdwg.mxu0
    %v149 = vld [vmem:[%s4] sm:$0xff]
    %v150 = vld [vmem:[%s4 + $0x8] sm:$0xff]
    %v151 = vld [vmem:[%s7] sm:$0xff]
    %v152 = vld [vmem:[%s7 + $0x8] sm:$0xff]
    %v153 = vld [vmem:[%s8] sm:$0xff]
    %v154 = vld [vmem:[%s8 + $0x8] sm:$0xff]
    %v155 = vld [vmem:[%s6] sm:$0x1]
    %v157 = vperm.slane %v155, 0
    %v158 = vld [vmem:[%s9] sm:$0x1]
    %v160 = vperm.slane %v158, 0
    %v162 = vld [vmem:[%s10] sm:$0x1]
    %v164 = vperm.slane %v162, 0
    %v165 = vld [vmem:[%s11] sm:$0x1]
    %v167 = vperm.slane %v165, 0
    %v168 = vld [vmem:[%s1] sm:$0xff]
    %v169 = vld [vmem:[%s2] sm:$0xff]
    %vm170 = vcmask 130048
    %v172 = vsel %vm170, %v168, 0
    %174 = vmatpush.msra.mxu0 0.0
    %175 = vmatpush.msra.mxu0 0.0
    %176 = vmatpush.msra.mxu0 0.0
    %177 = vmatpush.msra.mxu0 0.0
    %178 = vmatpush.msra.mxu0 0.0
    %179 = vmatpush.msra.mxu0 0.0
    %180 = vmatpush.msra.mxu0 0.0
    %181 = vmatpush.msra.mxu0 0.0
    %182 = vmatpush.msra.mxu0 0.0
    %183 = vmatpush.msra.mxu0 0.0
    %184 = vmatpush.msra.mxu0 0.0
    %185 = vmatpush.msra.mxu0 0.0
    %186 = vmatpush.msra.mxu0 0.0
    %187 = vmatpush.msra.mxu0 0.0
    %188 = vmatpush.msra.mxu0 %v150
    %189 = vmatpush.msra.mxu0 %v149
    %190 = vmatmul.f32.gmra.mxu0 %v172
    %v191 = vpop.f32.mrf.mxu0
    %v192 = vadd.f32 0.0, %v191
    %193 = vdwg.mxu0
    %v194 = vadd.f32 %v120, %v192
    %v195 = vxor.u32 %v194, 2147483648
    %v196 = vmul.f32 %v195, 1.442695
    %v197 = vpow.pop %v196
    %v198 = vadd.f32 %v197, 1.0
    %v199 = vrcp.pop %v198
    %v200 = vmul.f32 %v198, %v199
    %v201 = vsub.f32 1.0, %v200
    %v202 = vmul.f32 %v199, %v201
    %v203 = vadd.f32 %v199, %v202
    %vm204 = vweird.f32 %v198
    %vm205 = vweird.f32 %v199
    %vm206 = vmor %vm204, %vm205
    %v207 = vsel %vm206, %v199, %v203
    %v208 = vand.u32 2147483647, %v198
    %vm209 = vcmp.eq.f32.partialorder %v208, 8.507059e+37
    %v210 = vand.u32 %v198, 2147483648
    %v211 = vor.u32 1.1754944e-38, %v210
    %v212 = vsel %vm209, %v211, %v207
    %v213 = vmul.f32 1.0, %v212
    %214 = vrot.lane.b32.xlu0 %v157, 32
    %v215 = vpop.permute.xlu0 %214
    %v217 = vadd.f32 %v192, %v215
    %219 = vrot.lane.b32.xlu0 %v217, 96
    %v220 = vpop.permute.xlu0 %219
    %v222 = vmul.f32 %v213, %v220
    %224 = vrot.lane.b32.xlu0 %v222, 32
    %v225 = vpop.permute.xlu0 %224
    %v227 = vadd.f32 %v120, %v225
    %v228 = vtanh.pop %v227
    %v229 = vsub.f32 1.0, %v213
    %231 = vrot.lane.b32.xlu0 %v228, 112
    %v232 = vpop.permute.xlu0 %231
    %v234 = vmul.f32 %v229, %v232
    %235 = vrot.lane.b32.xlu0 %v168, 16
    %v236 = vpop.permute.xlu0 %235
    %v238 = vmul.f32 %v213, %v236
    %v239 = vadd.f32 %v234, %v238
    %241 = vrot.lane.b32.xlu0 %v239, 112
    %v242 = vpop.permute.xlu0 %241
    %v243 = vsel %vm170, %v242, 0
    %245 = vmatpush.msra.mxu0 0.0
    %246 = vmatpush.msra.mxu0 0.0
    %247 = vmatpush.msra.mxu0 0.0
    %248 = vmatpush.msra.mxu0 0.0
    %249 = vmatpush.msra.mxu0 0.0
    %250 = vmatpush.msra.mxu0 0.0
    %251 = vmatpush.msra.mxu0 0.0
    %252 = vmatpush.msra.mxu0 0.0
    %253 = vmatpush.msra.mxu0 0.0
    %254 = vmatpush.msra.mxu0 0.0
    %255 = vmatpush.msra.mxu0 0.0
    %256 = vmatpush.msra.mxu0 0.0
    %257 = vmatpush.msra.mxu0 0.0
    %258 = vmatpush.msra.mxu0 0.0
    %259 = vmatpush.msra.mxu0 %v152
    %260 = vmatpush.msra.mxu0 %v151
    %261 = vmatmul.f32.gmra.mxu0 %v243
    %v262 = vpop.f32.mrf.mxu0
    %v263 = vadd.f32 0.0, %v262
    %264 = vdwg.mxu0
    %v266 = vsel %vm170, %v169, 0
    %268 = vmatpush.msra.mxu0 0.0
    %269 = vmatpush.msra.mxu0 0.0
    %270 = vmatpush.msra.mxu0 0.0
    %271 = vmatpush.msra.mxu0 0.0
    %272 = vmatpush.msra.mxu0 0.0
    %273 = vmatpush.msra.mxu0 0.0
    %274 = vmatpush.msra.mxu0 0.0
    %275 = vmatpush.msra.mxu0 0.0
    %276 = vmatpush.msra.mxu0 0.0
    %277 = vmatpush.msra.mxu0 0.0
    %278 = vmatpush.msra.mxu0 0.0
    %279 = vmatpush.msra.mxu0 0.0
    %280 = vmatpush.msra.mxu0 0.0
    %281 = vmatpush.msra.mxu0 0.0
    %282 = vmatpush.msra.mxu0 %v154
    %283 = vmatpush.msra.mxu0 %v153
    %284 = vmatmul.f32.gmra.mxu0 %v266
    %v285 = vpop.f32.mrf.mxu0
    %v286 = vadd.f32 0.0, %v285
    %287 = vdwg.mxu0
    %v288 = vadd.f32 %v263, %v286
    %v289 = vadd.f32 %v288, %v160
    %v290 = vxor.u32 %v289, 2147483648
    %v291 = vmul.f32 %v290, 1.442695
    %v292 = vpow.pop %v291
    %v293 = vadd.f32 %v292, 1.0
    %v294 = vrcp.pop %v293
    %v295 = vmul.f32 %v293, %v294
    %v296 = vsub.f32 1.0, %v295
    %v297 = vmul.f32 %v294, %v296
    %v298 = vadd.f32 %v294, %v297
    %vm299 = vweird.f32 %v293
    %vm300 = vweird.f32 %v294
    %vm301 = vmor %vm299, %vm300
    %v302 = vsel %vm301, %v294, %v298
    %v303 = vand.u32 2147483647, %v293
    %vm304 = vcmp.eq.f32.partialorder %v303, 8.507059e+37
    %v305 = vand.u32 %v293, 2147483648
    %v306 = vor.u32 1.1754944e-38, %v305
    %v307 = vsel %vm304, %v306, %v302
    %v308 = vmul.f32 1.0, %v307
    %309 = vrot.lane.b32.xlu0 %v164, 32
    %v310 = vpop.permute.xlu0 %309
    %v312 = vadd.f32 %v263, %v310
    %313 = vrot.lane.b32.xlu0 %v167, 32
    %v314 = vpop.permute.xlu0 %313
    %v316 = vadd.f32 %v286, %v314
    %318 = vrot.lane.b32.xlu0 %v316, 96
    %v319 = vpop.permute.xlu0 %318
    %v321 = vmul.f32 %v308, %v319
    %323 = vrot.lane.b32.xlu0 %v321, 32
    %v324 = vpop.permute.xlu0 %323
    %v326 = vadd.f32 %v312, %v324
    %v327 = vtanh.pop %v326
    %v328 = vsub.f32 1.0, %v308
    %330 = vrot.lane.b32.xlu0 %v327, 112
    %v331 = vpop.permute.xlu0 %330
    %v333 = vmul.f32 %v328, %v331
    %334 = vrot.lane.b32.xlu0 %v169, 16
    %v335 = vpop.permute.xlu0 %334
    %v337 = vmul.f32 %v308, %v335
    %v338 = vadd.f32 %v333, %v337
    %339 = vmatpush.msra.mxu0 0.0
    %340 = vmatpush.msra.mxu0 0.0
    %341 = vmatpush.msra.mxu0 0.0
    %342 = vmatpush.msra.mxu0 0.0
    %343 = vmatpush.msra.mxu0 0.0
    %344 = vmatpush.msra.mxu0 0.0
    %345 = vmatpush.msra.mxu0 0.0
    %346 = vmatpush.msra.mxu0 0.0
    %347 = vmatpush.msra.mxu0 0.0
    %348 = vmatpush.msra.mxu0 0.0
    %349 = vmatpush.msra.mxu0 0.0
    %350 = vmatpush.msra.mxu0 0.0
    %351 = vmatpush.msra.mxu0 0.0
    %352 = vmatpush.msra.mxu0 0.0
    %353 = vmatpush.msra.mxu0 %v150
    %354 = vmatpush.msra.mxu0 %v149
    %355 = vmatmul.f32.gmra.mxu0 %v243
    %v356 = vpop.f32.mrf.mxu0
    %v357 = vadd.f32 0.0, %v356
    %358 = vdwg.mxu0
    %v359 = vadd.f32 %v123, %v357
    %v360 = vxor.u32 %v359, 2147483648
    %v361 = vmul.f32 %v360, 1.442695
    %v362 = vpow.pop %v361
    %v363 = vadd.f32 %v362, 1.0
    %v364 = vrcp.pop %v363
    %v365 = vmul.f32 %v363, %v364
    %v366 = vsub.f32 1.0, %v365
    %v367 = vmul.f32 %v364, %v366
    %v368 = vadd.f32 %v364, %v367
    %vm369 = vweird.f32 %v363
    %vm370 = vweird.f32 %v364
    %vm371 = vmor %vm369, %vm370
    %v372 = vsel %vm371, %v364, %v368
    %v373 = vand.u32 2147483647, %v363
    %vm374 = vcmp.eq.f32.partialorder %v373, 8.507059e+37
    %v375 = vand.u32 %v363, 2147483648
    %v376 = vor.u32 1.1754944e-38, %v375
    %v377 = vsel %vm374, %v376, %v372
    %v378 = vmul.f32 1.0, %v377
    %v379 = vadd.f32 %v357, %v215
    %381 = vrot.lane.b32.xlu0 %v379, 96
    %v382 = vpop.permute.xlu0 %381
    %v384 = vmul.f32 %v378, %v382
    %386 = vrot.lane.b32.xlu0 %v384, 32
    %v387 = vpop.permute.xlu0 %386
    %v389 = vadd.f32 %v123, %v387
    %v390 = vtanh.pop %v389
    %v391 = vsub.f32 1.0, %v378
    %393 = vrot.lane.b32.xlu0 %v390, 112
    %v394 = vpop.permute.xlu0 %393
    %v396 = vmul.f32 %v391, %v394
    %v397 = vmul.f32 %v378, %v239
    %v398 = vadd.f32 %v396, %v397
    %400 = vrot.lane.b32.xlu0 %v398, 112
    %v401 = vpop.permute.xlu0 %400
    %v402 = vsel %vm170, %v401, 0
    %404 = vmatpush.msra.mxu0 0.0
    %405 = vmatpush.msra.mxu0 0.0
    %406 = vmatpush.msra.mxu0 0.0
    %407 = vmatpush.msra.mxu0 0.0
    %408 = vmatpush.msra.mxu0 0.0
    %409 = vmatpush.msra.mxu0 0.0
    %410 = vmatpush.msra.mxu0 0.0
    %411 = vmatpush.msra.mxu0 0.0
    %412 = vmatpush.msra.mxu0 0.0
    %413 = vmatpush.msra.mxu0 0.0
    %414 = vmatpush.msra.mxu0 0.0
    %415 = vmatpush.msra.mxu0 0.0
    %416 = vmatpush.msra.mxu0 0.0
    %417 = vmatpush.msra.mxu0 0.0
    %418 = vmatpush.msra.mxu0 %v152
    %419 = vmatpush.msra.mxu0 %v151
    %420 = vmatmul.f32.gmra.mxu0 %v402
    %v421 = vpop.f32.mrf.mxu0
    %v422 = vadd.f32 0.0, %v421
    %423 = vdwg.mxu0
    %425 = vrot.lane.b32.xlu0 %v338, 112
    %v426 = vpop.permute.xlu0 %425
    %v427 = vsel %vm170, %v426, 0
    %429 = vmatpush.msra.mxu0 0.0
    %430 = vmatpush.msra.mxu0 0.0
    %431 = vmatpush.msra.mxu0 0.0
    %432 = vmatpush.msra.mxu0 0.0
    %433 = vmatpush.msra.mxu0 0.0
    %434 = vmatpush.msra.mxu0 0.0
    %435 = vmatpush.msra.mxu0 0.0
    %436 = vmatpush.msra.mxu0 0.0
    %437 = vmatpush.msra.mxu0 0.0
    %438 = vmatpush.msra.mxu0 0.0
    %439 = vmatpush.msra.mxu0 0.0
    %440 = vmatpush.msra.mxu0 0.0
    %441 = vmatpush.msra.mxu0 0.0
    %442 = vmatpush.msra.mxu0 0.0
    %443 = vmatpush.msra.mxu0 %v154
    %444 = vmatpush.msra.mxu0 %v153
    %445 = vmatmul.f32.gmra.mxu0 %v427
    %v446 = vpop.f32.mrf.mxu0
    %v447 = vadd.f32 0.0, %v446
    %448 = vdwg.mxu0
    %v449 = vadd.f32 %v422, %v447
    %v450 = vadd.f32 %v449, %v160
    %v451 = vxor.u32 %v450, 2147483648
    %v452 = vmul.f32 %v451, 1.442695
    %v453 = vpow.pop %v452
    %v454 = vadd.f32 %v453, 1.0
    %v455 = vrcp.pop %v454
    %v456 = vmul.f32 %v454, %v455
    %v457 = vsub.f32 1.0, %v456
    %v458 = vmul.f32 %v455, %v457
    %v459 = vadd.f32 %v455, %v458
    %vm460 = vweird.f32 %v454
    %vm461 = vweird.f32 %v455
    %vm462 = vmor %vm460, %vm461
    %v463 = vsel %vm462, %v455, %v459
    %v464 = vand.u32 2147483647, %v454
    %vm465 = vcmp.eq.f32.partialorder %v464, 8.507059e+37
    %v466 = vand.u32 %v454, 2147483648
    %v467 = vor.u32 1.1754944e-38, %v466
    %v468 = vsel %vm465, %v467, %v463
    %v469 = vmul.f32 1.0, %v468
    %v470 = vadd.f32 %v422, %v310
    %v471 = vadd.f32 %v447, %v314
    %473 = vrot.lane.b32.xlu0 %v471, 96
    %v474 = vpop.permute.xlu0 %473
    %v476 = vmul.f32 %v469, %v474
    %478 = vrot.lane.b32.xlu0 %v476, 32
    %v479 = vpop.permute.xlu0 %478
    %v481 = vadd.f32 %v470, %v479
    %v482 = vtanh.pop %v481
    %v483 = vsub.f32 1.0, %v469
    %485 = vrot.lane.b32.xlu0 %v482, 112
    %v486 = vpop.permute.xlu0 %485
    %v488 = vmul.f32 %v483, %v486
    %v489 = vmul.f32 %v469, %v338
    %v490 = vadd.f32 %v488, %v489
    %491 = vmatpush.msra.mxu0 0.0
    %492 = vmatpush.msra.mxu0 0.0
    %493 = vmatpush.msra.mxu0 0.0
    %494 = vmatpush.msra.mxu0 0.0
    %495 = vmatpush.msra.mxu0 0.0
    %496 = vmatpush.msra.mxu0 0.0
    %497 = vmatpush.msra.mxu0 0.0
    %498 = vmatpush.msra.mxu0 0.0
    %499 = vmatpush.msra.mxu0 0.0
    %500 = vmatpush.msra.mxu0 0.0
    %501 = vmatpush.msra.mxu0 0.0
    %502 = vmatpush.msra.mxu0 0.0
    %503 = vmatpush.msra.mxu0 0.0
    %504 = vmatpush.msra.mxu0 0.0
    %505 = vmatpush.msra.mxu0 %v150
    %506 = vmatpush.msra.mxu0 %v149
    %507 = vmatmul.f32.gmra.mxu0 %v402
    %v508 = vpop.f32.mrf.mxu0
    %v509 = vadd.f32 0.0, %v508
    %510 = vdwg.mxu0
    %v511 = vadd.f32 %v126, %v509
    %v512 = vxor.u32 %v511, 2147483648
    %v513 = vmul.f32 %v512, 1.442695
    %v514 = vpow.pop %v513
    %v515 = vadd.f32 %v514, 1.0
    %v516 = vrcp.pop %v515
    %v517 = vmul.f32 %v515, %v516
    %v518 = vsub.f32 1.0, %v517
    %v519 = vmul.f32 %v516, %v518
    %v520 = vadd.f32 %v516, %v519
    %vm521 = vweird.f32 %v515
    %vm522 = vweird.f32 %v516
    %vm523 = vmor %vm521, %vm522
    %v524 = vsel %vm523, %v516, %v520
    %v525 = vand.u32 2147483647, %v515
    %vm526 = vcmp.eq.f32.partialorder %v525, 8.507059e+37
    %v527 = vand.u32 %v515, 2147483648
    %v528 = vor.u32 1.1754944e-38, %v527
    %v529 = vsel %vm526, %v528, %v524
    %v530 = vmul.f32 1.0, %v529
    %v531 = vadd.f32 %v509, %v215
    %533 = vrot.lane.b32.xlu0 %v531, 96
    %v534 = vpop.permute.xlu0 %533
    %v536 = vmul.f32 %v530, %v534
    %538 = vrot.lane.b32.xlu0 %v536, 32
    %v539 = vpop.permute.xlu0 %538
    %v541 = vadd.f32 %v126, %v539
    %v542 = vtanh.pop %v541
    %v543 = vsub.f32 1.0, %v530
    %545 = vrot.lane.b32.xlu0 %v542, 112
    %v546 = vpop.permute.xlu0 %545
    %v548 = vmul.f32 %v543, %v546
    %v549 = vmul.f32 %v530, %v398
    %v550 = vadd.f32 %v548, %v549
    %552 = vrot.lane.b32.xlu0 %v550, 112
    %v553 = vpop.permute.xlu0 %552
    %v554 = vsel %vm170, %v553, 0
    %556 = vmatpush.msra.mxu0 0.0
    %557 = vmatpush.msra.mxu0 0.0
    %558 = vmatpush.msra.mxu0 0.0
    %559 = vmatpush.msra.mxu0 0.0
    %560 = vmatpush.msra.mxu0 0.0
    %561 = vmatpush.msra.mxu0 0.0
    %562 = vmatpush.msra.mxu0 0.0
    %563 = vmatpush.msra.mxu0 0.0
    %564 = vmatpush.msra.mxu0 0.0
    %565 = vmatpush.msra.mxu0 0.0
    %566 = vmatpush.msra.mxu0 0.0
    %567 = vmatpush.msra.mxu0 0.0
    %568 = vmatpush.msra.mxu0 0.0
    %569 = vmatpush.msra.mxu0 0.0
    %570 = vmatpush.msra.mxu0 %v152
    %571 = vmatpush.msra.mxu0 %v151
    %572 = vmatmul.f32.gmra.mxu0 %v554
    %v573 = vpop.f32.mrf.mxu0
    %v574 = vadd.f32 0.0, %v573
    %575 = vdwg.mxu0
    %577 = vrot.lane.b32.xlu0 %v490, 112
    %v578 = vpop.permute.xlu0 %577
    %v579 = vsel %vm170, %v578, 0
    %581 = vmatpush.msra.mxu0 0.0
    %582 = vmatpush.msra.mxu0 0.0
    %583 = vmatpush.msra.mxu0 0.0
    %584 = vmatpush.msra.mxu0 0.0
    %585 = vmatpush.msra.mxu0 0.0
    %586 = vmatpush.msra.mxu0 0.0
    %587 = vmatpush.msra.mxu0 0.0
    %588 = vmatpush.msra.mxu0 0.0
    %589 = vmatpush.msra.mxu0 0.0
    %590 = vmatpush.msra.mxu0 0.0
    %591 = vmatpush.msra.mxu0 0.0
    %592 = vmatpush.msra.mxu0 0.0
    %593 = vmatpush.msra.mxu0 0.0
    %594 = vmatpush.msra.mxu0 0.0
    %595 = vmatpush.msra.mxu0 %v154
    %596 = vmatpush.msra.mxu0 %v153
    %597 = vmatmul.f32.gmra.mxu0 %v579
    %v598 = vpop.f32.mrf.mxu0
    %v599 = vadd.f32 0.0, %v598
    %600 = vdwg.mxu0
    %v601 = vadd.f32 %v574, %v599
    %v602 = vadd.f32 %v601, %v160
    %v603 = vxor.u32 %v602, 2147483648
    %v604 = vmul.f32 %v603, 1.442695
    %v605 = vpow.pop %v604
    %v606 = vadd.f32 %v605, 1.0
    %v607 = vrcp.pop %v606
    %v608 = vmul.f32 %v606, %v607
    %v609 = vsub.f32 1.0, %v608
    %v610 = vmul.f32 %v607, %v609
    %v611 = vadd.f32 %v607, %v610
    %vm612 = vweird.f32 %v606
    %vm613 = vweird.f32 %v607
    %vm614 = vmor %vm612, %vm613
    %v615 = vsel %vm614, %v607, %v611
    %v616 = vand.u32 2147483647, %v606
    %vm617 = vcmp.eq.f32.partialorder %v616, 8.507059e+37
    %v618 = vand.u32 %v606, 2147483648
    %v619 = vor.u32 1.1754944e-38, %v618
    %v620 = vsel %vm617, %v619, %v615
    %v621 = vmul.f32 1.0, %v620
    %v622 = vadd.f32 %v574, %v310
    %v623 = vadd.f32 %v599, %v314
    %625 = vrot.lane.b32.xlu0 %v623, 96
    %v626 = vpop.permute.xlu0 %625
    %v628 = vmul.f32 %v621, %v626
    %630 = vrot.lane.b32.xlu0 %v628, 32
    %v631 = vpop.permute.xlu0 %630
    %v633 = vadd.f32 %v622, %v631
    %v634 = vtanh.pop %v633
    %v635 = vsub.f32 1.0, %v621
    %637 = vrot.lane.b32.xlu0 %v634, 112
    %v638 = vpop.permute.xlu0 %637
    %v640 = vmul.f32 %v635, %v638
    %v641 = vmul.f32 %v621, %v490
    %v642 = vadd.f32 %v640, %v641
    %643 = vmatpush.msra.mxu0 0.0
    %644 = vmatpush.msra.mxu0 0.0
    %645 = vmatpush.msra.mxu0 0.0
    %646 = vmatpush.msra.mxu0 0.0
    %647 = vmatpush.msra.mxu0 0.0
    %648 = vmatpush.msra.mxu0 0.0
    %649 = vmatpush.msra.mxu0 0.0
    %650 = vmatpush.msra.mxu0 0.0
    %651 = vmatpush.msra.mxu0 0.0
    %652 = vmatpush.msra.mxu0 0.0
    %653 = vmatpush.msra.mxu0 0.0
    %654 = vmatpush.msra.mxu0 0.0
    %655 = vmatpush.msra.mxu0 0.0
    %656 = vmatpush.msra.mxu0 0.0
    %657 = vmatpush.msra.mxu0 %v150
    %658 = vmatpush.msra.mxu0 %v149
    %659 = vmatmul.f32.gmra.mxu0 %v554
    %v660 = vpop.f32.mrf.mxu0
    %v661 = vadd.f32 0.0, %v660
    %662 = vdwg.mxu0
    %v663 = vadd.f32 %v129, %v661
    %v664 = vxor.u32 %v663, 2147483648
    %v665 = vmul.f32 %v664, 1.442695
    %v666 = vpow.pop %v665
    %v667 = vadd.f32 %v666, 1.0
    %v668 = vrcp.pop %v667
    %v669 = vmul.f32 %v667, %v668
    %v670 = vsub.f32 1.0, %v669
    %v671 = vmul.f32 %v668, %v670
    %v672 = vadd.f32 %v668, %v671
    %vm673 = vweird.f32 %v667
    %vm674 = vweird.f32 %v668
    %vm675 = vmor %vm673, %vm674
    %v676 = vsel %vm675, %v668, %v672
    %v677 = vand.u32 2147483647, %v667
    %vm678 = vcmp.eq.f32.partialorder %v677, 8.507059e+37
    %v679 = vand.u32 %v667, 2147483648
    %v680 = vor.u32 1.1754944e-38, %v679
    %v681 = vsel %vm678, %v680, %v676
    %v682 = vmul.f32 1.0, %v681
    %v683 = vadd.f32 %v661, %v215
    %685 = vrot.lane.b32.xlu0 %v683, 96
    %v686 = vpop.permute.xlu0 %685
    %v688 = vmul.f32 %v682, %v686
    %690 = vrot.lane.b32.xlu0 %v688, 32
    %v691 = vpop.permute.xlu0 %690
    %v693 = vadd.f32 %v129, %v691
    %v694 = vtanh.pop %v693
    %v695 = vsub.f32 1.0, %v682
    %697 = vrot.lane.b32.xlu0 %v694, 112
    %v698 = vpop.permute.xlu0 %697
    %v700 = vmul.f32 %v695, %v698
    %v701 = vmul.f32 %v682, %v550
    %v702 = vadd.f32 %v700, %v701
    %704 = vrot.lane.b32.xlu0 %v702, 112
    %v705 = vpop.permute.xlu0 %704
    %v706 = vsel %vm170, %v705, 0
    %708 = vmatpush.msra.mxu0 0.0
    %709 = vmatpush.msra.mxu0 0.0
    %710 = vmatpush.msra.mxu0 0.0
    %711 = vmatpush.msra.mxu0 0.0
    %712 = vmatpush.msra.mxu0 0.0
    %713 = vmatpush.msra.mxu0 0.0
    %714 = vmatpush.msra.mxu0 0.0
    %715 = vmatpush.msra.mxu0 0.0
    %716 = vmatpush.msra.mxu0 0.0
    %717 = vmatpush.msra.mxu0 0.0
    %718 = vmatpush.msra.mxu0 0.0
    %719 = vmatpush.msra.mxu0 0.0
    %720 = vmatpush.msra.mxu0 0.0
    %721 = vmatpush.msra.mxu0 0.0
    %722 = vmatpush.msra.mxu0 %v152
    %723 = vmatpush.msra.mxu0 %v151
    %724 = vmatmul.f32.gmra.mxu0 %v706
    %v725 = vpop.f32.mrf.mxu0
    %v726 = vadd.f32 0.0, %v725
    %727 = vdwg.mxu0
    %729 = vrot.lane.b32.xlu0 %v642, 112
    %v730 = vpop.permute.xlu0 %729
    %v731 = vsel %vm170, %v730, 0
    %733 = vmatpush.msra.mxu0 0.0
    %734 = vmatpush.msra.mxu0 0.0
    %735 = vmatpush.msra.mxu0 0.0
    %736 = vmatpush.msra.mxu0 0.0
    %737 = vmatpush.msra.mxu0 0.0
    %738 = vmatpush.msra.mxu0 0.0
    %739 = vmatpush.msra.mxu0 0.0
    %740 = vmatpush.msra.mxu0 0.0
    %741 = vmatpush.msra.mxu0 0.0
    %742 = vmatpush.msra.mxu0 0.0
    %743 = vmatpush.msra.mxu0 0.0
    %744 = vmatpush.msra.mxu0 0.0
    %745 = vmatpush.msra.mxu0 0.0
    %746 = vmatpush.msra.mxu0 0.0
    %747 = vmatpush.msra.mxu0 %v154
    %748 = vmatpush.msra.mxu0 %v153
    %749 = vmatmul.f32.gmra.mxu0 %v731
    %v750 = vpop.f32.mrf.mxu0
    %v751 = vadd.f32 0.0, %v750
    %752 = vdwg.mxu0
    %v753 = vadd.f32 %v726, %v751
    %v754 = vadd.f32 %v753, %v160
    %v755 = vxor.u32 %v754, 2147483648
    %v756 = vmul.f32 %v755, 1.442695
    %v757 = vpow.pop %v756
    %v758 = vadd.f32 %v757, 1.0
    %v759 = vrcp.pop %v758
    %v760 = vmul.f32 %v758, %v759
    %v761 = vsub.f32 1.0, %v760
    %v762 = vmul.f32 %v759, %v761
    %v763 = vadd.f32 %v759, %v762
    %vm764 = vweird.f32 %v758
    %vm765 = vweird.f32 %v759
    %vm766 = vmor %vm764, %vm765
    %v767 = vsel %vm766, %v759, %v763
    %v768 = vand.u32 2147483647, %v758
    %vm769 = vcmp.eq.f32.partialorder %v768, 8.507059e+37
    %v770 = vand.u32 %v758, 2147483648
    %v771 = vor.u32 1.1754944e-38, %v770
    %v772 = vsel %vm769, %v771, %v767
    %v773 = vmul.f32 1.0, %v772
    %v774 = vadd.f32 %v726, %v310
    %v775 = vadd.f32 %v751, %v314
    %777 = vrot.lane.b32.xlu0 %v775, 96
    %v778 = vpop.permute.xlu0 %777
    %v780 = vmul.f32 %v773, %v778
    %782 = vrot.lane.b32.xlu0 %v780, 32
    %v783 = vpop.permute.xlu0 %782
    %v785 = vadd.f32 %v774, %v783
    %v786 = vtanh.pop %v785
    %v787 = vsub.f32 1.0, %v773
    %789 = vrot.lane.b32.xlu0 %v786, 112
    %v790 = vpop.permute.xlu0 %789
    %v792 = vmul.f32 %v787, %v790
    %v793 = vmul.f32 %v773, %v642
    %v794 = vadd.f32 %v792, %v793
    %795 = vmatpush.msra.mxu0 0.0
    %796 = vmatpush.msra.mxu0 0.0
    %797 = vmatpush.msra.mxu0 0.0
    %798 = vmatpush.msra.mxu0 0.0
    %799 = vmatpush.msra.mxu0 0.0
    %800 = vmatpush.msra.mxu0 0.0
    %801 = vmatpush.msra.mxu0 0.0
    %802 = vmatpush.msra.mxu0 0.0
    %803 = vmatpush.msra.mxu0 0.0
    %804 = vmatpush.msra.mxu0 0.0
    %805 = vmatpush.msra.mxu0 0.0
    %806 = vmatpush.msra.mxu0 0.0
    %807 = vmatpush.msra.mxu0 0.0
    %808 = vmatpush.msra.mxu0 0.0
    %809 = vmatpush.msra.mxu0 %v150
    %810 = vmatpush.msra.mxu0 %v149
    %811 = vmatmul.f32.gmra.mxu0 %v706
    %v812 = vpop.f32.mrf.mxu0
    %v813 = vadd.f32 0.0, %v812
    %814 = vdwg.mxu0
    %v815 = vadd.f32 %v132, %v813
    %v816 = vxor.u32 %v815, 2147483648
    %v817 = vmul.f32 %v816, 1.442695
    %v818 = vpow.pop %v817
    %v819 = vadd.f32 %v818, 1.0
    %v820 = vrcp.pop %v819
    %v821 = vmul.f32 %v819, %v820
    %v822 = vsub.f32 1.0, %v821
    %v823 = vmul.f32 %v820, %v822
    %v824 = vadd.f32 %v820, %v823
    %vm825 = vweird.f32 %v819
    %vm826 = vweird.f32 %v820
    %vm827 = vmor %vm825, %vm826
    %v828 = vsel %vm827, %v820, %v824
    %v829 = vand.u32 2147483647, %v819
    %vm830 = vcmp.eq.f32.partialorder %v829, 8.507059e+37
    %v831 = vand.u32 %v819, 2147483648
    %v832 = vor.u32 1.1754944e-38, %v831
    %v833 = vsel %vm830, %v832, %v828
    %v834 = vmul.f32 1.0, %v833
    %v835 = vadd.f32 %v813, %v215
    %837 = vrot.lane.b32.xlu0 %v835, 96
    %v838 = vpop.permute.xlu0 %837
    %v840 = vmul.f32 %v834, %v838
    %842 = vrot.lane.b32.xlu0 %v840, 32
    %v843 = vpop.permute.xlu0 %842
    %v845 = vadd.f32 %v132, %v843
    %v846 = vtanh.pop %v845
    %v847 = vsub.f32 1.0, %v834
    %849 = vrot.lane.b32.xlu0 %v846, 112
    %v850 = vpop.permute.xlu0 %849
    %v852 = vmul.f32 %v847, %v850
    %v853 = vmul.f32 %v834, %v702
    %v854 = vadd.f32 %v852, %v853
    %856 = vrot.lane.b32.xlu0 %v854, 112
    %v857 = vpop.permute.xlu0 %856
    %v858 = vsel %vm170, %v857, 0
    %860 = vmatpush.msra.mxu0 0.0
    %861 = vmatpush.msra.mxu0 0.0
    %862 = vmatpush.msra.mxu0 0.0
    %863 = vmatpush.msra.mxu0 0.0
    %864 = vmatpush.msra.mxu0 0.0
    %865 = vmatpush.msra.mxu0 0.0
    %866 = vmatpush.msra.mxu0 0.0
    %867 = vmatpush.msra.mxu0 0.0
    %868 = vmatpush.msra.mxu0 0.0
    %869 = vmatpush.msra.mxu0 0.0
    %870 = vmatpush.msra.mxu0 0.0
    %871 = vmatpush.msra.mxu0 0.0
    %872 = vmatpush.msra.mxu0 0.0
    %873 = vmatpush.msra.mxu0 0.0
    %874 = vmatpush.msra.mxu0 %v152
    %875 = vmatpush.msra.mxu0 %v151
    %876 = vmatmul.f32.gmra.mxu0 %v858
    %v877 = vpop.f32.mrf.mxu0
    %v878 = vadd.f32 0.0, %v877
    %879 = vdwg.mxu0
    %881 = vrot.lane.b32.xlu0 %v794, 112
    %v882 = vpop.permute.xlu0 %881
    %v883 = vsel %vm170, %v882, 0
    %885 = vmatpush.msra.mxu0 0.0
    %886 = vmatpush.msra.mxu0 0.0
    %887 = vmatpush.msra.mxu0 0.0
    %888 = vmatpush.msra.mxu0 0.0
    %889 = vmatpush.msra.mxu0 0.0
    %890 = vmatpush.msra.mxu0 0.0
    %891 = vmatpush.msra.mxu0 0.0
    %892 = vmatpush.msra.mxu0 0.0
    %893 = vmatpush.msra.mxu0 0.0
    %894 = vmatpush.msra.mxu0 0.0
    %895 = vmatpush.msra.mxu0 0.0
    %896 = vmatpush.msra.mxu0 0.0
    %897 = vmatpush.msra.mxu0 0.0
    %898 = vmatpush.msra.mxu0 0.0
    %899 = vmatpush.msra.mxu0 %v154
    %900 = vmatpush.msra.mxu0 %v153
    %901 = vmatmul.f32.gmra.mxu0 %v883
    %v902 = vpop.f32.mrf.mxu0
    %v903 = vadd.f32 0.0, %v902
    %904 = vdwg.mxu0
    %v905 = vadd.f32 %v878, %v903
    %v906 = vadd.f32 %v905, %v160
    %v907 = vxor.u32 %v906, 2147483648
    %v908 = vmul.f32 %v907, 1.442695
    %v909 = vpow.pop %v908
    %v910 = vadd.f32 %v909, 1.0
    %v911 = vrcp.pop %v910
    %v912 = vmul.f32 %v910, %v911
    %v913 = vsub.f32 1.0, %v912
    %v914 = vmul.f32 %v911, %v913
    %v915 = vadd.f32 %v911, %v914
    %vm916 = vweird.f32 %v910
    %vm917 = vweird.f32 %v911
    %vm918 = vmor %vm916, %vm917
    %v919 = vsel %vm918, %v911, %v915
    %v920 = vand.u32 2147483647, %v910
    %vm921 = vcmp.eq.f32.partialorder %v920, 8.507059e+37
    %v922 = vand.u32 %v910, 2147483648
    %v923 = vor.u32 1.1754944e-38, %v922
    %v924 = vsel %vm921, %v923, %v919
    %v925 = vmul.f32 1.0, %v924
    %v926 = vadd.f32 %v878, %v310
    %v927 = vadd.f32 %v903, %v314
    %929 = vrot.lane.b32.xlu0 %v927, 96
    %v930 = vpop.permute.xlu0 %929
    %v932 = vmul.f32 %v925, %v930
    %934 = vrot.lane.b32.xlu0 %v932, 32
    %v935 = vpop.permute.xlu0 %934
    %v937 = vadd.f32 %v926, %v935
    %v938 = vtanh.pop %v937
    %v939 = vsub.f32 1.0, %v925
    %941 = vrot.lane.b32.xlu0 %v938, 112
    %v942 = vpop.permute.xlu0 %941
    %v944 = vmul.f32 %v939, %v942
    %v945 = vmul.f32 %v925, %v794
    %v946 = vadd.f32 %v944, %v945
    %947 = vmatpush.msra.mxu0 0.0
    %948 = vmatpush.msra.mxu0 0.0
    %949 = vmatpush.msra.mxu0 0.0
    %950 = vmatpush.msra.mxu0 0.0
    %951 = vmatpush.msra.mxu0 0.0
    %952 = vmatpush.msra.mxu0 0.0
    %953 = vmatpush.msra.mxu0 0.0
    %954 = vmatpush.msra.mxu0 0.0
    %955 = vmatpush.msra.mxu0 0.0
    %956 = vmatpush.msra.mxu0 0.0
    %957 = vmatpush.msra.mxu0 0.0
    %958 = vmatpush.msra.mxu0 0.0
    %959 = vmatpush.msra.mxu0 0.0
    %960 = vmatpush.msra.mxu0 0.0
    %961 = vmatpush.msra.mxu0 %v150
    %962 = vmatpush.msra.mxu0 %v149
    %963 = vmatmul.f32.gmra.mxu0 %v858
    %v964 = vpop.f32.mrf.mxu0
    %v965 = vadd.f32 0.0, %v964
    %966 = vdwg.mxu0
    %v967 = vadd.f32 %v135, %v965
    %v968 = vxor.u32 %v967, 2147483648
    %v969 = vmul.f32 %v968, 1.442695
    %v970 = vpow.pop %v969
    %v971 = vadd.f32 %v970, 1.0
    %v972 = vrcp.pop %v971
    %v973 = vmul.f32 %v971, %v972
    %v974 = vsub.f32 1.0, %v973
    %v975 = vmul.f32 %v972, %v974
    %v976 = vadd.f32 %v972, %v975
    %vm977 = vweird.f32 %v971
    %vm978 = vweird.f32 %v972
    %vm979 = vmor %vm977, %vm978
    %v980 = vsel %vm979, %v972, %v976
    %v981 = vand.u32 2147483647, %v971
    %vm982 = vcmp.eq.f32.partialorder %v981, 8.507059e+37
    %v983 = vand.u32 %v971, 2147483648
    %v984 = vor.u32 1.1754944e-38, %v983
    %v985 = vsel %vm982, %v984, %v980
    %v986 = vmul.f32 1.0, %v985
    %v987 = vadd.f32 %v965, %v215
    %989 = vrot.lane.b32.xlu0 %v987, 96
    %v990 = vpop.permute.xlu0 %989
    %v992 = vmul.f32 %v986, %v990
    %994 = vrot.lane.b32.xlu0 %v992, 32
    %v995 = vpop.permute.xlu0 %994
    %v997 = vadd.f32 %v135, %v995
    %v998 = vtanh.pop %v997
    %v999 = vsub.f32 1.0, %v986
    %1001 = vrot.lane.b32.xlu0 %v998, 112
    %v1002 = vpop.permute.xlu0 %1001
    %v1004 = vmul.f32 %v999, %v1002
    %v1005 = vmul.f32 %v986, %v854
    %v1006 = vadd.f32 %v1004, %v1005
    %1008 = vrot.lane.b32.xlu0 %v1006, 112
    %v1009 = vpop.permute.xlu0 %1008
    %v1010 = vsel %vm170, %v1009, 0
    %1012 = vmatpush.msra.mxu0 0.0
    %1013 = vmatpush.msra.mxu0 0.0
    %1014 = vmatpush.msra.mxu0 0.0
    %1015 = vmatpush.msra.mxu0 0.0
    %1016 = vmatpush.msra.mxu0 0.0
    %1017 = vmatpush.msra.mxu0 0.0
    %1018 = vmatpush.msra.mxu0 0.0
    %1019 = vmatpush.msra.mxu0 0.0
    %1020 = vmatpush.msra.mxu0 0.0
    %1021 = vmatpush.msra.mxu0 0.0
    %1022 = vmatpush.msra.mxu0 0.0
    %1023 = vmatpush.msra.mxu0 0.0
    %1024 = vmatpush.msra.mxu0 0.0
    %1025 = vmatpush.msra.mxu0 0.0
    %1026 = vmatpush.msra.mxu0 %v152
    %1027 = vmatpush.msra.mxu0 %v151
    %1028 = vmatmul.f32.gmra.mxu0 %v1010
    %v1029 = vpop.f32.mrf.mxu0
    %v1030 = vadd.f32 0.0, %v1029
    %1031 = vdwg.mxu0
    %1033 = vrot.lane.b32.xlu0 %v946, 112
    %v1034 = vpop.permute.xlu0 %1033
    %v1035 = vsel %vm170, %v1034, 0
    %1037 = vmatpush.msra.mxu0 0.0
    %1038 = vmatpush.msra.mxu0 0.0
    %1039 = vmatpush.msra.mxu0 0.0
    %1040 = vmatpush.msra.mxu0 0.0
    %1041 = vmatpush.msra.mxu0 0.0
    %1042 = vmatpush.msra.mxu0 0.0
    %1043 = vmatpush.msra.mxu0 0.0
    %1044 = vmatpush.msra.mxu0 0.0
    %1045 = vmatpush.msra.mxu0 0.0
    %1046 = vmatpush.msra.mxu0 0.0
    %1047 = vmatpush.msra.mxu0 0.0
    %1048 = vmatpush.msra.mxu0 0.0
    %1049 = vmatpush.msra.mxu0 0.0
    %1050 = vmatpush.msra.mxu0 0.0
    %1051 = vmatpush.msra.mxu0 %v154
    %1052 = vmatpush.msra.mxu0 %v153
    %1053 = vmatmul.f32.gmra.mxu0 %v1035
    %v1054 = vpop.f32.mrf.mxu0
    %v1055 = vadd.f32 0.0, %v1054
    %1056 = vdwg.mxu0
    %v1057 = vadd.f32 %v1030, %v1055
    %v1058 = vadd.f32 %v1057, %v160
    %v1059 = vxor.u32 %v1058, 2147483648
    %v1060 = vmul.f32 %v1059, 1.442695
    %v1061 = vpow.pop %v1060
    %v1062 = vadd.f32 %v1061, 1.0
    %v1063 = vrcp.pop %v1062
    %v1064 = vmul.f32 %v1062, %v1063
    %v1065 = vsub.f32 1.0, %v1064
    %v1066 = vmul.f32 %v1063, %v1065
    %v1067 = vadd.f32 %v1063, %v1066
    %vm1068 = vweird.f32 %v1062
    %vm1069 = vweird.f32 %v1063
    %vm1070 = vmor %vm1068, %vm1069
    %v1071 = vsel %vm1070, %v1063, %v1067
    %v1072 = vand.u32 2147483647, %v1062
    %vm1073 = vcmp.eq.f32.partialorder %v1072, 8.507059e+37
    %v1074 = vand.u32 %v1062, 2147483648
    %v1075 = vor.u32 1.1754944e-38, %v1074
    %v1076 = vsel %vm1073, %v1075, %v1071
    %v1077 = vmul.f32 1.0, %v1076
    %v1078 = vadd.f32 %v1030, %v310
    %v1079 = vadd.f32 %v1055, %v314
    %1081 = vrot.lane.b32.xlu0 %v1079, 96
    %v1082 = vpop.permute.xlu0 %1081
    %v1084 = vmul.f32 %v1077, %v1082
    %1086 = vrot.lane.b32.xlu0 %v1084, 32
    %v1087 = vpop.permute.xlu0 %1086
    %v1089 = vadd.f32 %v1078, %v1087
    %v1090 = vtanh.pop %v1089
    %v1091 = vsub.f32 1.0, %v1077
    %1093 = vrot.lane.b32.xlu0 %v1090, 112
    %v1094 = vpop.permute.xlu0 %1093
    %v1096 = vmul.f32 %v1091, %v1094
    %v1097 = vmul.f32 %v1077, %v946
    %v1098 = vadd.f32 %v1096, %v1097
    %1099 = vmatpush.msra.mxu0 0.0
    %1100 = vmatpush.msra.mxu0 0.0
    %1101 = vmatpush.msra.mxu0 0.0
    %1102 = vmatpush.msra.mxu0 0.0
    %1103 = vmatpush.msra.mxu0 0.0
    %1104 = vmatpush.msra.mxu0 0.0
    %1105 = vmatpush.msra.mxu0 0.0
    %1106 = vmatpush.msra.mxu0 0.0
    %1107 = vmatpush.msra.mxu0 0.0
    %1108 = vmatpush.msra.mxu0 0.0
    %1109 = vmatpush.msra.mxu0 0.0
    %1110 = vmatpush.msra.mxu0 0.0
    %1111 = vmatpush.msra.mxu0 0.0
    %1112 = vmatpush.msra.mxu0 0.0
    %1113 = vmatpush.msra.mxu0 %v150
    %1114 = vmatpush.msra.mxu0 %v149
    %1115 = vmatmul.f32.gmra.mxu0 %v1010
    %v1116 = vpop.f32.mrf.mxu0
    %v1117 = vadd.f32 0.0, %v1116
    %1118 = vdwg.mxu0
    %v1119 = vadd.f32 %v138, %v1117
    %v1120 = vxor.u32 %v1119, 2147483648
    %v1121 = vmul.f32 %v1120, 1.442695
    %v1122 = vpow.pop %v1121
    %v1123 = vadd.f32 %v1122, 1.0
    %v1124 = vrcp.pop %v1123
    %v1125 = vmul.f32 %v1123, %v1124
    %v1126 = vsub.f32 1.0, %v1125
    %v1127 = vmul.f32 %v1124, %v1126
    %v1128 = vadd.f32 %v1124, %v1127
    %vm1129 = vweird.f32 %v1123
    %vm1130 = vweird.f32 %v1124
    %vm1131 = vmor %vm1129, %vm1130
    %v1132 = vsel %vm1131, %v1124, %v1128
    %v1133 = vand.u32 2147483647, %v1123
    %vm1134 = vcmp.eq.f32.partialorder %v1133, 8.507059e+37
    %v1135 = vand.u32 %v1123, 2147483648
    %v1136 = vor.u32 1.1754944e-38, %v1135
    %v1137 = vsel %vm1134, %v1136, %v1132
    %v1138 = vmul.f32 1.0, %v1137
    %v1139 = vadd.f32 %v1117, %v215
    %1141 = vrot.lane.b32.xlu0 %v1139, 96
    %v1142 = vpop.permute.xlu0 %1141
    %v1144 = vmul.f32 %v1138, %v1142
    %1146 = vrot.lane.b32.xlu0 %v1144, 32
    %v1147 = vpop.permute.xlu0 %1146
    %v1149 = vadd.f32 %v138, %v1147
    %v1150 = vtanh.pop %v1149
    %v1151 = vsub.f32 1.0, %v1138
    %1153 = vrot.lane.b32.xlu0 %v1150, 112
    %v1154 = vpop.permute.xlu0 %1153
    %v1156 = vmul.f32 %v1151, %v1154
    %v1157 = vmul.f32 %v1138, %v1006
    %v1158 = vadd.f32 %v1156, %v1157
    %1160 = vrot.lane.b32.xlu0 %v1158, 112
    %v1161 = vpop.permute.xlu0 %1160
    %v1162 = vsel %vm170, %v1161, 0
    %1164 = vmatpush.msra.mxu0 0.0
    %1165 = vmatpush.msra.mxu0 0.0
    %1166 = vmatpush.msra.mxu0 0.0
    %1167 = vmatpush.msra.mxu0 0.0
    %1168 = vmatpush.msra.mxu0 0.0
    %1169 = vmatpush.msra.mxu0 0.0
    %1170 = vmatpush.msra.mxu0 0.0
    %1171 = vmatpush.msra.mxu0 0.0
    %1172 = vmatpush.msra.mxu0 0.0
    %1173 = vmatpush.msra.mxu0 0.0
    %1174 = vmatpush.msra.mxu0 0.0
    %1175 = vmatpush.msra.mxu0 0.0
    %1176 = vmatpush.msra.mxu0 0.0
    %1177 = vmatpush.msra.mxu0 0.0
    %1178 = vmatpush.msra.mxu0 %v152
    %1179 = vmatpush.msra.mxu0 %v151
    %1180 = vmatmul.f32.gmra.mxu0 %v1162
    %v1181 = vpop.f32.mrf.mxu0
    %v1182 = vadd.f32 0.0, %v1181
    %1183 = vdwg.mxu0
    %1185 = vrot.lane.b32.xlu0 %v1098, 112
    %v1186 = vpop.permute.xlu0 %1185
    %v1187 = vsel %vm170, %v1186, 0
    %1189 = vmatpush.msra.mxu0 0.0
    %1190 = vmatpush.msra.mxu0 0.0
    %1191 = vmatpush.msra.mxu0 0.0
    %1192 = vmatpush.msra.mxu0 0.0
    %1193 = vmatpush.msra.mxu0 0.0
    %1194 = vmatpush.msra.mxu0 0.0
    %1195 = vmatpush.msra.mxu0 0.0
    %1196 = vmatpush.msra.mxu0 0.0
    %1197 = vmatpush.msra.mxu0 0.0
    %1198 = vmatpush.msra.mxu0 0.0
    %1199 = vmatpush.msra.mxu0 0.0
    %1200 = vmatpush.msra.mxu0 0.0
    %1201 = vmatpush.msra.mxu0 0.0
    %1202 = vmatpush.msra.mxu0 0.0
    %1203 = vmatpush.msra.mxu0 %v154
    %1204 = vmatpush.msra.mxu0 %v153
    %1205 = vmatmul.f32.gmra.mxu0 %v1187
    %v1206 = vpop.f32.mrf.mxu0
    %v1207 = vadd.f32 0.0, %v1206
    %1208 = vdwg.mxu0
    %v1209 = vadd.f32 %v1182, %v1207
    %v1210 = vadd.f32 %v1209, %v160
    %v1211 = vxor.u32 %v1210, 2147483648
    %v1212 = vmul.f32 %v1211, 1.442695
    %v1213 = vpow.pop %v1212
    %v1214 = vadd.f32 %v1213, 1.0
    %v1215 = vrcp.pop %v1214
    %v1216 = vmul.f32 %v1214, %v1215
    %v1217 = vsub.f32 1.0, %v1216
    %v1218 = vmul.f32 %v1215, %v1217
    %v1219 = vadd.f32 %v1215, %v1218
    %vm1220 = vweird.f32 %v1214
    %vm1221 = vweird.f32 %v1215
    %vm1222 = vmor %vm1220, %vm1221
    %v1223 = vsel %vm1222, %v1215, %v1219
    %v1224 = vand.u32 2147483647, %v1214
    %vm1225 = vcmp.eq.f32.partialorder %v1224, 8.507059e+37
    %v1226 = vand.u32 %v1214, 2147483648
    %v1227 = vor.u32 1.1754944e-38, %v1226
    %v1228 = vsel %vm1225, %v1227, %v1223
    %v1229 = vmul.f32 1.0, %v1228
    %v1230 = vadd.f32 %v1182, %v310
    %v1231 = vadd.f32 %v1207, %v314
    %1233 = vrot.lane.b32.xlu0 %v1231, 96
    %v1234 = vpop.permute.xlu0 %1233
    %v1236 = vmul.f32 %v1229, %v1234
    %1238 = vrot.lane.b32.xlu0 %v1236, 32
    %v1239 = vpop.permute.xlu0 %1238
    %v1241 = vadd.f32 %v1230, %v1239
    %v1242 = vtanh.pop %v1241
    %v1243 = vsub.f32 1.0, %v1229
    %1245 = vrot.lane.b32.xlu0 %v1242, 112
    %v1246 = vpop.permute.xlu0 %1245
    %v1248 = vmul.f32 %v1243, %v1246
    %v1249 = vmul.f32 %v1229, %v1098
    %v1250 = vadd.f32 %v1248, %v1249
    %1251 = vmatpush.msra.mxu0 0.0
    %1252 = vmatpush.msra.mxu0 0.0
    %1253 = vmatpush.msra.mxu0 0.0
    %1254 = vmatpush.msra.mxu0 0.0
    %1255 = vmatpush.msra.mxu0 0.0
    %1256 = vmatpush.msra.mxu0 0.0
    %1257 = vmatpush.msra.mxu0 0.0
    %1258 = vmatpush.msra.mxu0 0.0
    %1259 = vmatpush.msra.mxu0 0.0
    %1260 = vmatpush.msra.mxu0 0.0
    %1261 = vmatpush.msra.mxu0 0.0
    %1262 = vmatpush.msra.mxu0 0.0
    %1263 = vmatpush.msra.mxu0 0.0
    %1264 = vmatpush.msra.mxu0 0.0
    %1265 = vmatpush.msra.mxu0 %v150
    %1266 = vmatpush.msra.mxu0 %v149
    %1267 = vmatmul.f32.gmra.mxu0 %v1162
    %v1268 = vpop.f32.mrf.mxu0
    %v1269 = vadd.f32 0.0, %v1268
    %1270 = vdwg.mxu0
    %v1271 = vadd.f32 %v141, %v1269
    %v1272 = vxor.u32 %v1271, 2147483648
    %v1273 = vmul.f32 %v1272, 1.442695
    %v1274 = vpow.pop %v1273
    %v1275 = vadd.f32 %v1274, 1.0
    %v1276 = vrcp.pop %v1275
    %v1277 = vmul.f32 %v1275, %v1276
    %v1278 = vsub.f32 1.0, %v1277
    %v1279 = vmul.f32 %v1276, %v1278
    %v1280 = vadd.f32 %v1276, %v1279
    %vm1281 = vweird.f32 %v1275
    %vm1282 = vweird.f32 %v1276
    %vm1283 = vmor %vm1281, %vm1282
    %v1284 = vsel %vm1283, %v1276, %v1280
    %v1285 = vand.u32 2147483647, %v1275
    %vm1286 = vcmp.eq.f32.partialorder %v1285, 8.507059e+37
    %v1287 = vand.u32 %v1275, 2147483648
    %v1288 = vor.u32 1.1754944e-38, %v1287
    %v1289 = vsel %vm1286, %v1288, %v1284
    %v1290 = vmul.f32 1.0, %v1289
    %v1291 = vadd.f32 %v1269, %v215
    %1293 = vrot.lane.b32.xlu0 %v1291, 96
    %v1294 = vpop.permute.xlu0 %1293
    %v1296 = vmul.f32 %v1290, %v1294
    %1298 = vrot.lane.b32.xlu0 %v1296, 32
    %v1299 = vpop.permute.xlu0 %1298
    %v1301 = vadd.f32 %v141, %v1299
    %v1302 = vtanh.pop %v1301
    %v1303 = vsub.f32 1.0, %v1290
    %1305 = vrot.lane.b32.xlu0 %v1302, 112
    %v1306 = vpop.permute.xlu0 %1305
    %v1308 = vmul.f32 %v1303, %v1306
    %v1309 = vmul.f32 %v1290, %v1158
    %v1310 = vadd.f32 %v1308, %v1309
    %1312 = vrot.lane.b32.xlu0 %v1310, 112
    %v1313 = vpop.permute.xlu0 %1312
    %v1314 = vsel %vm170, %v1313, 0
    %1316 = vmatpush.msra.mxu0 0.0
    %1317 = vmatpush.msra.mxu0 0.0
    %1318 = vmatpush.msra.mxu0 0.0
    %1319 = vmatpush.msra.mxu0 0.0
    %1320 = vmatpush.msra.mxu0 0.0
    %1321 = vmatpush.msra.mxu0 0.0
    %1322 = vmatpush.msra.mxu0 0.0
    %1323 = vmatpush.msra.mxu0 0.0
    %1324 = vmatpush.msra.mxu0 0.0
    %1325 = vmatpush.msra.mxu0 0.0
    %1326 = vmatpush.msra.mxu0 0.0
    %1327 = vmatpush.msra.mxu0 0.0
    %1328 = vmatpush.msra.mxu0 0.0
    %1329 = vmatpush.msra.mxu0 0.0
    %1330 = vmatpush.msra.mxu0 %v152
    %1331 = vmatpush.msra.mxu0 %v151
    %1332 = vmatmul.f32.gmra.mxu0 %v1314
    %v1333 = vpop.f32.mrf.mxu0
    %v1334 = vadd.f32 0.0, %v1333
    %1335 = vdwg.mxu0
    %1337 = vrot.lane.b32.xlu0 %v1250, 112
    %v1338 = vpop.permute.xlu0 %1337
    %v1339 = vsel %vm170, %v1338, 0
    %1341 = vmatpush.msra.mxu0 0.0
    %1342 = vmatpush.msra.mxu0 0.0
    %1343 = vmatpush.msra.mxu0 0.0
    %1344 = vmatpush.msra.mxu0 0.0
    %1345 = vmatpush.msra.mxu0 0.0
    %1346 = vmatpush.msra.mxu0 0.0
    %1347 = vmatpush.msra.mxu0 0.0
    %1348 = vmatpush.msra.mxu0 0.0
    %1349 = vmatpush.msra.mxu0 0.0
    %1350 = vmatpush.msra.mxu0 0.0
    %1351 = vmatpush.msra.mxu0 0.0
    %1352 = vmatpush.msra.mxu0 0.0
    %1353 = vmatpush.msra.mxu0 0.0
    %1354 = vmatpush.msra.mxu0 0.0
    %1355 = vmatpush.msra.mxu0 %v154
    %1356 = vmatpush.msra.mxu0 %v153
    %1357 = vmatmul.f32.gmra.mxu0 %v1339
    %v1358 = vpop.f32.mrf.mxu0
    %v1359 = vadd.f32 0.0, %v1358
    %1360 = vdwg.mxu0
    %v1361 = vadd.f32 %v1334, %v1359
    %v1362 = vadd.f32 %v1361, %v160
    %v1363 = vxor.u32 %v1362, 2147483648
    %v1364 = vmul.f32 %v1363, 1.442695
    %v1365 = vpow.pop %v1364
    %v1366 = vadd.f32 %v1365, 1.0
    %v1367 = vrcp.pop %v1366
    %v1368 = vmul.f32 %v1366, %v1367
    %v1369 = vsub.f32 1.0, %v1368
    %v1370 = vmul.f32 %v1367, %v1369
    %v1371 = vadd.f32 %v1367, %v1370
    %vm1372 = vweird.f32 %v1366
    %vm1373 = vweird.f32 %v1367
    %vm1374 = vmor %vm1372, %vm1373
    %v1375 = vsel %vm1374, %v1367, %v1371
    %v1376 = vand.u32 2147483647, %v1366
    %vm1377 = vcmp.eq.f32.partialorder %v1376, 8.507059e+37
    %v1378 = vand.u32 %v1366, 2147483648
    %v1379 = vor.u32 1.1754944e-38, %v1378
    %v1380 = vsel %vm1377, %v1379, %v1375
    %v1381 = vmul.f32 1.0, %v1380
    %v1382 = vadd.f32 %v1334, %v310
    %v1383 = vadd.f32 %v1359, %v314
    %1385 = vrot.lane.b32.xlu0 %v1383, 96
    %v1386 = vpop.permute.xlu0 %1385
    %v1388 = vmul.f32 %v1381, %v1386
    %1390 = vrot.lane.b32.xlu0 %v1388, 32
    %v1391 = vpop.permute.xlu0 %1390
    %v1393 = vadd.f32 %v1382, %v1391
    %v1394 = vtanh.pop %v1393
    %v1395 = vsub.f32 1.0, %v1381
    %1397 = vrot.lane.b32.xlu0 %v1394, 112
    %v1398 = vpop.permute.xlu0 %1397
    %v1400 = vmul.f32 %v1395, %v1398
    %v1401 = vmul.f32 %v1381, %v1250
    %v1402 = vadd.f32 %v1400, %v1401
    %1403 = vmatpush.msra.mxu0 0.0
    %1404 = vmatpush.msra.mxu0 0.0
    %1405 = vmatpush.msra.mxu0 0.0
    %1406 = vmatpush.msra.mxu0 0.0
    %1407 = vmatpush.msra.mxu0 0.0
    %1408 = vmatpush.msra.mxu0 0.0
    %1409 = vmatpush.msra.mxu0 0.0
    %1410 = vmatpush.msra.mxu0 0.0
    %1411 = vmatpush.msra.mxu0 0.0
    %1412 = vmatpush.msra.mxu0 0.0
    %1413 = vmatpush.msra.mxu0 0.0
    %1414 = vmatpush.msra.mxu0 0.0
    %1415 = vmatpush.msra.mxu0 0.0
    %1416 = vmatpush.msra.mxu0 0.0
    %1417 = vmatpush.msra.mxu0 %v150
    %1418 = vmatpush.msra.mxu0 %v149
    %1419 = vmatmul.f32.gmra.mxu0 %v1314
    %v1420 = vpop.f32.mrf.mxu0
    %v1421 = vadd.f32 0.0, %v1420
    %1422 = vdwg.mxu0
    %v1423 = vadd.f32 %v144, %v1421
    %v1424 = vxor.u32 %v1423, 2147483648
    %v1425 = vmul.f32 %v1424, 1.442695
    %v1426 = vpow.pop %v1425
    %v1427 = vadd.f32 %v1426, 1.0
    %v1428 = vrcp.pop %v1427
    %v1429 = vmul.f32 %v1427, %v1428
    %v1430 = vsub.f32 1.0, %v1429
    %v1431 = vmul.f32 %v1428, %v1430
    %v1432 = vadd.f32 %v1428, %v1431
    %vm1433 = vweird.f32 %v1427
    %vm1434 = vweird.f32 %v1428
    %vm1435 = vmor %vm1433, %vm1434
    %v1436 = vsel %vm1435, %v1428, %v1432
    %v1437 = vand.u32 2147483647, %v1427
    %vm1438 = vcmp.eq.f32.partialorder %v1437, 8.507059e+37
    %v1439 = vand.u32 %v1427, 2147483648
    %v1440 = vor.u32 1.1754944e-38, %v1439
    %v1441 = vsel %vm1438, %v1440, %v1436
    %v1442 = vmul.f32 1.0, %v1441
    %v1443 = vadd.f32 %v1421, %v215
    %1445 = vrot.lane.b32.xlu0 %v1443, 96
    %v1446 = vpop.permute.xlu0 %1445
    %v1448 = vmul.f32 %v1442, %v1446
    %1450 = vrot.lane.b32.xlu0 %v1448, 32
    %v1451 = vpop.permute.xlu0 %1450
    %v1453 = vadd.f32 %v144, %v1451
    %v1454 = vtanh.pop %v1453
    %v1455 = vsub.f32 1.0, %v1442
    %1457 = vrot.lane.b32.xlu0 %v1454, 112
    %v1458 = vpop.permute.xlu0 %1457
    %v1460 = vmul.f32 %v1455, %v1458
    %v1461 = vmul.f32 %v1442, %v1310
    %v1462 = vadd.f32 %v1460, %v1461
    %1464 = vrot.lane.b32.xlu0 %v1462, 112
    %v1465 = vpop.permute.xlu0 %1464
    %v1466 = vsel %vm170, %v1465, 0
    %1468 = vmatpush.msra.mxu0 0.0
    %1469 = vmatpush.msra.mxu0 0.0
    %1470 = vmatpush.msra.mxu0 0.0
    %1471 = vmatpush.msra.mxu0 0.0
    %1472 = vmatpush.msra.mxu0 0.0
    %1473 = vmatpush.msra.mxu0 0.0
    %1474 = vmatpush.msra.mxu0 0.0
    %1475 = vmatpush.msra.mxu0 0.0
    %1476 = vmatpush.msra.mxu0 0.0
    %1477 = vmatpush.msra.mxu0 0.0
    %1478 = vmatpush.msra.mxu0 0.0
    %1479 = vmatpush.msra.mxu0 0.0
    %1480 = vmatpush.msra.mxu0 0.0
    %1481 = vmatpush.msra.mxu0 0.0
    %1482 = vmatpush.msra.mxu0 %v152
    %1483 = vmatpush.msra.mxu0 %v151
    %1484 = vmatmul.f32.gmra.mxu0 %v1466
    %v1485 = vpop.f32.mrf.mxu0
    %v1486 = vadd.f32 0.0, %v1485
    %1487 = vdwg.mxu0
    %1489 = vrot.lane.b32.xlu0 %v1402, 112
    %v1490 = vpop.permute.xlu0 %1489
    %v1491 = vsel %vm170, %v1490, 0
    %1493 = vmatpush.msra.mxu0 0.0
    %1494 = vmatpush.msra.mxu0 0.0
    %1495 = vmatpush.msra.mxu0 0.0
    %1496 = vmatpush.msra.mxu0 0.0
    %1497 = vmatpush.msra.mxu0 0.0
    %1498 = vmatpush.msra.mxu0 0.0
    %1499 = vmatpush.msra.mxu0 0.0
    %1500 = vmatpush.msra.mxu0 0.0
    %1501 = vmatpush.msra.mxu0 0.0
    %1502 = vmatpush.msra.mxu0 0.0
    %1503 = vmatpush.msra.mxu0 0.0
    %1504 = vmatpush.msra.mxu0 0.0
    %1505 = vmatpush.msra.mxu0 0.0
    %1506 = vmatpush.msra.mxu0 0.0
    %1507 = vmatpush.msra.mxu0 %v154
    %1508 = vmatpush.msra.mxu0 %v153
    %1509 = vmatmul.f32.gmra.mxu0 %v1491
    %v1510 = vpop.f32.mrf.mxu0
    %v1511 = vadd.f32 0.0, %v1510
    %1512 = vdwg.mxu0
    %v1513 = vadd.f32 %v1486, %v1511
    %v1514 = vadd.f32 %v1513, %v160
    %v1515 = vxor.u32 %v1514, 2147483648
    %v1516 = vmul.f32 %v1515, 1.442695
    %v1517 = vpow.pop %v1516
    %v1518 = vadd.f32 %v1517, 1.0
    %v1519 = vrcp.pop %v1518
    %v1520 = vmul.f32 %v1518, %v1519
    %v1521 = vsub.f32 1.0, %v1520
    %v1522 = vmul.f32 %v1519, %v1521
    %v1523 = vadd.f32 %v1519, %v1522
    %vm1524 = vweird.f32 %v1518
    %vm1525 = vweird.f32 %v1519
    %vm1526 = vmor %vm1524, %vm1525
    %v1527 = vsel %vm1526, %v1519, %v1523
    %v1528 = vand.u32 2147483647, %v1518
    %vm1529 = vcmp.eq.f32.partialorder %v1528, 8.507059e+37
    %v1530 = vand.u32 %v1518, 2147483648
    %v1531 = vor.u32 1.1754944e-38, %v1530
    %v1532 = vsel %vm1529, %v1531, %v1527
    %v1533 = vmul.f32 1.0, %v1532
    %v1534 = vadd.f32 %v1486, %v310
    %v1535 = vadd.f32 %v1511, %v314
    %1537 = vrot.lane.b32.xlu0 %v1535, 96
    %v1538 = vpop.permute.xlu0 %1537
    %v1540 = vmul.f32 %v1533, %v1538
    %1542 = vrot.lane.b32.xlu0 %v1540, 32
    %v1543 = vpop.permute.xlu0 %1542
    %v1545 = vadd.f32 %v1534, %v1543
    %v1546 = vtanh.pop %v1545
    %v1547 = vsub.f32 1.0, %v1533
    %1549 = vrot.lane.b32.xlu0 %v1546, 112
    %v1550 = vpop.permute.xlu0 %1549
    %v1552 = vmul.f32 %v1547, %v1550
    %v1553 = vmul.f32 %v1533, %v1402
    %v1554 = vadd.f32 %v1552, %v1553
    %1555 = vmatpush.msra.mxu0 0.0
    %1556 = vmatpush.msra.mxu0 0.0
    %1557 = vmatpush.msra.mxu0 0.0
    %1558 = vmatpush.msra.mxu0 0.0
    %1559 = vmatpush.msra.mxu0 0.0
    %1560 = vmatpush.msra.mxu0 0.0
    %1561 = vmatpush.msra.mxu0 0.0
    %1562 = vmatpush.msra.mxu0 0.0
    %1563 = vmatpush.msra.mxu0 0.0
    %1564 = vmatpush.msra.mxu0 0.0
    %1565 = vmatpush.msra.mxu0 0.0
    %1566 = vmatpush.msra.mxu0 0.0
    %1567 = vmatpush.msra.mxu0 0.0
    %1568 = vmatpush.msra.mxu0 0.0
    %1569 = vmatpush.msra.mxu0 %v150
    %1570 = vmatpush.msra.mxu0 %v149
    %1571 = vmatmul.f32.gmra.mxu0 %v1466
    %v1572 = vpop.f32.mrf.mxu0
    %v1573 = vadd.f32 0.0, %v1572
    %1574 = vdwg.mxu0
    %v1575 = vadd.f32 %v147, %v1573
    %v1576 = vxor.u32 %v1575, 2147483648
    %v1577 = vmul.f32 %v1576, 1.442695
    %v1578 = vpow.pop %v1577
    %v1579 = vadd.f32 %v1578, 1.0
    %v1580 = vrcp.pop %v1579
    %v1581 = vmul.f32 %v1579, %v1580
    %v1582 = vsub.f32 1.0, %v1581
    %v1583 = vmul.f32 %v1580, %v1582
    %v1584 = vadd.f32 %v1580, %v1583
    %vm1585 = vweird.f32 %v1579
    %vm1586 = vweird.f32 %v1580
    %vm1587 = vmor %vm1585, %vm1586
    %v1588 = vsel %vm1587, %v1580, %v1584
    %v1589 = vand.u32 2147483647, %v1579
    %vm1590 = vcmp.eq.f32.partialorder %v1589, 8.507059e+37
    %v1591 = vand.u32 %v1579, 2147483648
    %v1592 = vor.u32 1.1754944e-38, %v1591
    %v1593 = vsel %vm1590, %v1592, %v1588
    %v1594 = vmul.f32 1.0, %v1593
    %v1595 = vadd.f32 %v1573, %v215
    %1597 = vrot.lane.b32.xlu0 %v1595, 96
    %v1598 = vpop.permute.xlu0 %1597
    %v1600 = vmul.f32 %v1594, %v1598
    %1602 = vrot.lane.b32.xlu0 %v1600, 32
    %v1603 = vpop.permute.xlu0 %1602
    %v1605 = vadd.f32 %v147, %v1603
    %v1606 = vtanh.pop %v1605
    %v1607 = vsub.f32 1.0, %v1594
    %1609 = vrot.lane.b32.xlu0 %v1606, 112
    %v1610 = vpop.permute.xlu0 %1609
    %v1612 = vmul.f32 %v1607, %v1610
    %v1613 = vmul.f32 %v1594, %v1462
    %v1614 = vadd.f32 %v1612, %v1613
    %1616 = vrot.lane.b32.xlu0 %v1614, 112
    %v1617 = vpop.permute.xlu0 %1616
    %v1618 = vsel %vm170, %v1617, 0
    %1620 = vmatpush.msra.mxu0 0.0
    %1621 = vmatpush.msra.mxu0 0.0
    %1622 = vmatpush.msra.mxu0 0.0
    %1623 = vmatpush.msra.mxu0 0.0
    %1624 = vmatpush.msra.mxu0 0.0
    %1625 = vmatpush.msra.mxu0 0.0
    %1626 = vmatpush.msra.mxu0 0.0
    %1627 = vmatpush.msra.mxu0 0.0
    %1628 = vmatpush.msra.mxu0 0.0
    %1629 = vmatpush.msra.mxu0 0.0
    %1630 = vmatpush.msra.mxu0 0.0
    %1631 = vmatpush.msra.mxu0 0.0
    %1632 = vmatpush.msra.mxu0 0.0
    %1633 = vmatpush.msra.mxu0 0.0
    %1634 = vmatpush.msra.mxu0 %v152
    %1635 = vmatpush.msra.mxu0 %v151
    %1636 = vmatmul.f32.gmra.mxu0 %v1618
    %v1637 = vpop.f32.mrf.mxu0
    %v1638 = vadd.f32 0.0, %v1637
    %1639 = vdwg.mxu0
    %1641 = vrot.lane.b32.xlu0 %v1554, 112
    %v1642 = vpop.permute.xlu0 %1641
    %v1643 = vsel %vm170, %v1642, 0
    %1645 = vmatpush.msra.mxu0 0.0
    %1646 = vmatpush.msra.mxu0 0.0
    %1647 = vmatpush.msra.mxu0 0.0
    %1648 = vmatpush.msra.mxu0 0.0
    %1649 = vmatpush.msra.mxu0 0.0
    %1650 = vmatpush.msra.mxu0 0.0
    %1651 = vmatpush.msra.mxu0 0.0
    %1652 = vmatpush.msra.mxu0 0.0
    %1653 = vmatpush.msra.mxu0 0.0
    %1654 = vmatpush.msra.mxu0 0.0
    %1655 = vmatpush.msra.mxu0 0.0
    %1656 = vmatpush.msra.mxu0 0.0
    %1657 = vmatpush.msra.mxu0 0.0
    %1658 = vmatpush.msra.mxu0 0.0
    %1659 = vmatpush.msra.mxu0 %v154
    %1660 = vmatpush.msra.mxu0 %v153
    %1661 = vmatmul.f32.gmra.mxu0 %v1643
    %v1662 = vpop.f32.mrf.mxu0
    %v1663 = vadd.f32 0.0, %v1662
    %1664 = vdwg.mxu0
    %v1665 = vadd.f32 %v1638, %v1663
    %v1666 = vadd.f32 %v1665, %v160
    %v1667 = vxor.u32 %v1666, 2147483648
    %v1668 = vmul.f32 %v1667, 1.442695
    %v1669 = vpow.pop %v1668
    %v1670 = vadd.f32 %v1669, 1.0
    %v1671 = vrcp.pop %v1670
    %v1672 = vmul.f32 %v1670, %v1671
    %v1673 = vsub.f32 1.0, %v1672
    %v1674 = vmul.f32 %v1671, %v1673
    %v1675 = vadd.f32 %v1671, %v1674
    %vm1676 = vweird.f32 %v1670
    %vm1677 = vweird.f32 %v1671
    %vm1678 = vmor %vm1676, %vm1677
    %v1679 = vsel %vm1678, %v1671, %v1675
    %v1680 = vand.u32 2147483647, %v1670
    %vm1681 = vcmp.eq.f32.partialorder %v1680, 8.507059e+37
    %v1682 = vand.u32 %v1670, 2147483648
    %v1683 = vor.u32 1.1754944e-38, %v1682
    %v1684 = vsel %vm1681, %v1683, %v1679
    %v1685 = vmul.f32 1.0, %v1684
    %v1686 = vadd.f32 %v1638, %v310
    %v1687 = vadd.f32 %v1663, %v314
    %1689 = vrot.lane.b32.xlu0 %v1687, 96
    %v1690 = vpop.permute.xlu0 %1689
    %v1692 = vmul.f32 %v1685, %v1690
    %1694 = vrot.lane.b32.xlu0 %v1692, 32
    %v1695 = vpop.permute.xlu0 %1694
    %v1697 = vadd.f32 %v1686, %v1695
    %v1698 = vtanh.pop %v1697
    %v1699 = vsub.f32 1.0, %v1685
    %1701 = vrot.lane.b32.xlu0 %v1698, 112
    %v1702 = vpop.permute.xlu0 %1701
    %v1704 = vmul.f32 %v1699, %v1702
    %v1705 = vmul.f32 %v1685, %v1554
    %v1706 = vadd.f32 %v1704, %v1705
    %v1707 = vld [vmem:[%s12] sm:$0xff]
    %v1708 = vld [vmem:[%s12 + $0x8] sm:$0xff]
    %v1709 = vld [vmem:[%s13] sm:$0x1]
    %v1711 = vperm.slane %v1709, 0
    %1714 = vrot.lane.b32.xlu0 %v1706, 112
    %v1715 = vpop.permute.xlu0 %1714
    %v1716 = vsel %vm170, %v1715, 0
    %1718 = vmatpush.msra.mxu0 0.0
    %1719 = vmatpush.msra.mxu0 0.0
    %1720 = vmatpush.msra.mxu0 0.0
    %1721 = vmatpush.msra.mxu0 0.0
    %1722 = vmatpush.msra.mxu0 0.0
    %1723 = vmatpush.msra.mxu0 0.0
    %1724 = vmatpush.msra.mxu0 0.0
    %1725 = vmatpush.msra.mxu0 0.0
    %1726 = vmatpush.msra.mxu0 0.0
    %1727 = vmatpush.msra.mxu0 0.0
    %1728 = vmatpush.msra.mxu0 0.0
    %1729 = vmatpush.msra.mxu0 0.0
    %1730 = vmatpush.msra.mxu0 0.0
    %1731 = vmatpush.msra.mxu0 0.0
    %1732 = vmatpush.msra.mxu0 %v1708
    %1733 = vmatpush.msra.mxu0 %v1707
    %1734 = vmatmul.f32.gmra.mxu0 %v427
    %v1735 = vpop.f32.mrf.mxu0
    %v1736 = vadd.f32 %v1711, %v1735
    %1737 = vmatmul.f32.gmra.mxu0 %v579
    %v1738 = vpop.f32.mrf.mxu0
    %v1739 = vadd.f32 %v1711, %v1738
    %1740 = vmatmul.f32.gmra.mxu0 %v731
    %v1741 = vpop.f32.mrf.mxu0
    %v1742 = vadd.f32 %v1711, %v1741
    %1743 = vmatmul.f32.gmra.mxu0 %v883
    %v1744 = vpop.f32.mrf.mxu0
    %v1745 = vadd.f32 %v1711, %v1744
    %1746 = vmatmul.f32.gmra.mxu0 %v1035
    %v1747 = vpop.f32.mrf.mxu0
    %v1748 = vadd.f32 %v1711, %v1747
    %1749 = vmatmul.f32.gmra.mxu0 %v1187
    %v1750 = vpop.f32.mrf.mxu0
    %v1751 = vadd.f32 %v1711, %v1750
    %1752 = vmatmul.f32.gmra.mxu0 %v1339
    %v1753 = vpop.f32.mrf.mxu0
    %v1754 = vadd.f32 %v1711, %v1753
    %1755 = vmatmul.f32.gmra.mxu0 %v1491
    %v1756 = vpop.f32.mrf.mxu0
    %v1757 = vadd.f32 %v1711, %v1756
    %1758 = vmatmul.f32.gmra.mxu0 %v1643
    %v1759 = vpop.f32.mrf.mxu0
    %v1760 = vadd.f32 %v1711, %v1759
    %1761 = vmatmul.f32.gmra.mxu0 %v1716
    %v1762 = vpop.f32.mrf.mxu0
    %v1763 = vadd.f32 %v1711, %v1762
    %1764 = vdwg.mxu0
    %1765 = vst.msk [vmem:[%s14] sm:$0xff] %vm67, %v1736
    %1766 = vst.msk [vmem:[%s14 + $0x8] sm:$0xff] %vm67, %v1739
    %1767 = vst.msk [vmem:[%s14 + $0x10] sm:$0xff] %vm67, %v1742
    %1768 = vst.msk [vmem:[%s14 + $0x18] sm:$0xff] %vm67, %v1745
    %1769 = vst.msk [vmem:[%s14 + $0x20] sm:$0xff] %vm67, %v1748
    %1770 = vst.msk [vmem:[%s14 + $0x28] sm:$0xff] %vm67, %v1751
    %1771 = vst.msk [vmem:[%s14 + $0x30] sm:$0xff] %vm67, %v1754
    %1772 = vst.msk [vmem:[%s14 + $0x38] sm:$0xff] %vm67, %v1757
    %1773 = vst.msk [vmem:[%s14 + $0x40] sm:$0xff] %vm67, %v1760
    %1774 = vst.msk [vmem:[%s14 + $0x48] sm:$0xff] %vm67, %v1763
    %1776 = vst.msk [vmem:[#allocation2] sm:$0xff] %vm170, %v1617
    %1778 = vst.msk [vmem:[#allocation4] sm:$0xff] %vm170, %v1715
    // Predicated region
    $region58: #{multi_regression_gru.1} parent=1 // pred_check
      _
    $region59: #{multi_regression_gru.1} parent=1 // pred_check_branch
      %1780 = sbr.rel (0) target = $region61
    $region60: #{multi_regression_gru.1} parent=1 // pred_region
      _
    $region61: #{multi_regression_gru.1} parent=1 // pred_fallthru
      _
    // Predicated region
    $region62: #{multi_regression_gru.1} parent=1 // pred_check
      _
    $region63: #{multi_regression_gru.1} parent=1 // pred_check_branch
      %1782 = sbr.rel (0) target = $region65
    $region64: #{multi_regression_gru.1} parent=1 // pred_region
      %1784 = vsyncadd [#allocation3], 0
      %s1786 = sshll.u32 [#allocation2], 4
      %s1787 = int_to_ptr.vmem [resolvable:$true] %s1786
      %s1788 = sshll.u32 %s15, 4
      %s1789 = int_to_ptr.hbm [resolvable:$true] %s1788
      %1791 = dma.vmem_to_hbm [thread:$0]  %s1787, 128, %s1789, [#allocation3]
    $region65: #{multi_regression_gru.1} parent=1 // pred_fallthru
      _
    // Predicated region
    $region66: #{multi_regression_gru.1} parent=1 // pred_check
      _
    $region67: #{multi_regression_gru.1} parent=1 // pred_check_branch
      %1793 = sbr.rel (0) target = $region69
    $region68: #{multi_regression_gru.1} parent=1 // pred_region
      %1795 = vsyncadd [#allocation5], 0
      %s1797 = sshll.u32 [#allocation4], 4
      %s1798 = int_to_ptr.vmem [resolvable:$true] %s1797
      %s1799 = sshll.u32 %s16, 4
      %s1800 = int_to_ptr.hbm [resolvable:$true] %s1799
      %1802 = dma.vmem_to_hbm [thread:$0]  %s1798, 128, %s1800, [#allocation5]
    $region69: #{multi_regression_gru.1} parent=1 // pred_fallthru
      _
    // Predicated region
    $region70: #{multi_regression_gru.1} parent=1 // pred_check
      _
    $region71: #{multi_regression_gru.1} parent=1 // pred_check_branch
      %1804 = sbr.rel (0) target = $region73
    $region72: #{multi_regression_gru.1} parent=1 // pred_region
      _
    $region73: #{multi_regression_gru.1} parent=1 // pred_fallthru
      _
    // Predicated region
    $region74: #{multi_regression_gru.1} parent=1 // pred_check
      _
    $region75: #{multi_regression_gru.1} parent=1 // pred_check_branch
      %1806 = sbr.rel (0) target = $region77
    $region76: #{multi_regression_gru.1} parent=1 // pred_region
      %1808 = dma.done [#allocation3], 128
    $region77: #{multi_regression_gru.1} parent=1 // pred_fallthru
      _
    // Predicated region
    $region78: #{multi_regression_gru.1} parent=1 // pred_check
      _
    $region79: #{multi_regression_gru.1} parent=1 // pred_check_branch
      %1810 = sbr.rel (0) target = $region81
    $region80: #{multi_regression_gru.1} parent=1 // pred_region
      %1812 = dma.done [#allocation5], 128
    $region81: #{multi_regression_gru.1} parent=1 // pred_fallthru
      _
    %1813 = vsyncpa [#allocation3], 1
    %1814 = vsyncpa [#allocation5], 1

</llo_original>
